<compile_context>
chip_gen: v5e
topology: v5e:2x2
jax: 0.10.0
libtpu: 0.0.40
codegen_flags: <defaults>
</compile_context>

<pallas_src>
import functools

import jax
import jax.numpy as jnp
from jax import lax
from jax.experimental import pallas as pl
from jax.experimental.pallas import tpu as pltpu

EPS = 1e-5
H1, H2 = 512, 128
MAX_TILE = 1024
VMEM_LIMIT = 32 << 20  # bytes; actual per-call footprint is a few MiB


def _round_up(x, m):
    return (x + m - 1) // m * m


# ----------------------------- kernels -----------------------------------------------


def _stats1_kernel(x_ref, w1_ref, s_ref, ss_ref):
    """BN1 batch statistics of y1 = x @ w1.  y1 is NOT written to HBM (recomputed later)."""
    y = jnp.dot(x_ref[...].astype(jnp.bfloat16), w1_ref[...],
                preferred_element_type=jnp.float32)

    @pl.when(pl.program_id(0) == 0)
    def _():
        s_ref[...] = jnp.zeros_like(s_ref)
        ss_ref[...] = jnp.zeros_like(ss_ref)

    # Zero-padded batch rows produce y == 0 and contribute nothing (no mask needed).
    s_ref[...] += jnp.sum(y, axis=0, keepdims=True)
    ss_ref[...] += jnp.sum(y * y, axis=0, keepdims=True)


def _layer2_kernel(inv_n, n_true, tile, mask_rows,
                   x_ref, w1_ref, s1_ref, ss1_ref, g1_ref, be1_ref, w2_ref,
                   y2_ref, s2_ref, ss2_ref):
    """Recompute y1 = x@w1 in VMEM, BN1 (from accumulated stats) + ReLU, Linear(512,128).

    y2 is written to HBM in bf16; BN2 sum/sumsq are accumulated from the f32 values.
    """
    y1 = jnp.dot(x_ref[...].astype(jnp.bfloat16), w1_ref[...],
                 preferred_element_type=jnp.float32)
    mu = s1_ref[...] * inv_n
    var = jnp.maximum(ss1_ref[...] * inv_n - mu * mu, 0.0)
    scale = g1_ref[...] * lax.rsqrt(var + EPS)          # (1, 512)
    shift = be1_ref[...] - mu * scale                    # (1, 512)
    h = jnp.maximum(y1 * scale + shift, 0.0)             # FMA-form normalize + ReLU

    y2 = jnp.dot(h.astype(jnp.bfloat16), w2_ref[...],
                 preferred_element_type=jnp.float32)
    y2_ref[...] = y2.astype(y2_ref.dtype)

    @pl.when(pl.program_id(0) == 0)
    def _():
        s2_ref[...] = jnp.zeros_like(s2_ref)
        ss2_ref[...] = jnp.zeros_like(ss2_ref)

    if mask_rows:
        # Padded batch rows pass through ReLU(shift) != 0; exclude them from BN2 stats.
        rows = pl.program_id(0) * tile + lax.broadcasted_iota(jnp.int32, (tile, 1), 0)
        y2 = jnp.where(rows < n_true, y2, 0.0)

    s2_ref[...] += jnp.sum(y2, axis=0, keepdims=True)
    ss2_ref[...] += jnp.sum(y2 * y2, axis=0, keepdims=True)


def _layer3_kernel(inv_n, y2_ref, s2_ref, ss2_ref, g2_ref, be2_ref, w3_ref, b3_ref,
                   out_ref):
    """BN2 (from accumulated stats) + ReLU + final Linear(128, entry_dim)."""
    mu = s2_ref[...] * inv_n
    var = jnp.maximum(ss2_ref[...] * inv_n - mu * mu, 0.0)
    scale = g2_ref[...] * lax.rsqrt(var + EPS)
    shift = be2_ref[...] - mu * scale
    h = jnp.maximum(y2_ref[...].astype(jnp.float32) * scale + shift, 0.0)
    out_ref[...] = (
        jnp.dot(h.astype(jnp.bfloat16), w3_ref[...], preferred_element_type=jnp.float32)
        + b3_ref[...]
    ).astype(out_ref.dtype)


# ----------------------------- wrapper ------------------------------------------------


@jax.jit
def encoder_forward(x, kparams):
    w1, g1, be1, w2, g2, be2, w3, b3 = kparams
    n, d_in = x.shape
    h1 = w1.shape[1]              # 512
    h2 = w2.shape[1]              # 128
    e = w3.shape[1]               # entry_dim (no lane padding)

    # Batch tiling: up to 1024 rows per tile; pad the batch with zero rows to a tile
    # multiple (never fall back to "whole batch in one tile" for awkward n).
    tile = MAX_TILE if n >= MAX_TILE else _round_up(n, 8)
    n_pad = _round_up(n, tile)
    padded = n_pad != n
    if padded:
        x = jnp.pad(x, ((0, n_pad - n), (0, 0)))
    nt = n_pad // tile
    inv_n = 1.0 / n

    row = lambda i: (i, 0)        # per-batch-tile block
    rep = lambda i: (0, 0)        # resident block (weights / BN params / accumulators)

    stat1 = jax.ShapeDtypeStruct((1, h1), jnp.float32)
    stat2 = jax.ShapeDtypeStruct((1, h2), jnp.float32)

    cp_arb = pltpu.CompilerParams(dimension_semantics=("arbitrary",),
                                  vmem_limit_bytes=VMEM_LIMIT)
    cp_par = pltpu.CompilerParams(dimension_semantics=("parallel",),
                                  vmem_limit_bytes=VMEM_LIMIT)

    # ---- pass 1: BN1 statistics of x @ w1 (stats-only, no y1 materialization) ----
    s1, ss1 = pl.pallas_call(
        _stats1_kernel,
        grid=(nt,),
        in_specs=[pl.BlockSpec((tile, d_in), row),
                  pl.BlockSpec((d_in, h1), rep)],
        out_shape=(stat1, stat1),
        out_specs=(pl.BlockSpec((1, h1), rep), pl.BlockSpec((1, h1), rep)),
        compiler_params=cp_arb,
    )(x, w1)

    # ---- pass 2: recompute y1, BN1 + ReLU + Linear(512,128) (+ BN2 stats) ----
    y2, s2, ss2 = pl.pallas_call(
        functools.partial(_layer2_kernel, inv_n, n, tile, padded),
        grid=(nt,),
        in_specs=[pl.BlockSpec((tile, d_in), row),
                  pl.BlockSpec((d_in, h1), rep),
                  pl.BlockSpec((1, h1), rep),
                  pl.BlockSpec((1, h1), rep),
                  pl.BlockSpec((1, h1), rep),
                  pl.BlockSpec((1, h1), rep),
                  pl.BlockSpec((h1, h2), rep)],
        out_shape=(jax.ShapeDtypeStruct((n_pad, h2), jnp.bfloat16), stat2, stat2),
        out_specs=(pl.BlockSpec((tile, h2), row),
                   pl.BlockSpec((1, h2), rep),
                   pl.BlockSpec((1, h2), rep)),
        compiler_params=cp_arb,
    )(x, w1, s1, ss1, g1, be1, w2)

    # ---- pass 3: BN2 + ReLU + Linear(128, entry_dim) ----
    out = pl.pallas_call(
        functools.partial(_layer3_kernel, inv_n),
        grid=(nt,),
        in_specs=[pl.BlockSpec((tile, h2), row),
                  pl.BlockSpec((1, h2), rep),
                  pl.BlockSpec((1, h2), rep),
                  pl.BlockSpec((1, h2), rep),
                  pl.BlockSpec((1, h2), rep),
                  pl.BlockSpec((h2, e), rep),
                  pl.BlockSpec((1, e), rep)],
        out_shape=jax.ShapeDtypeStruct((n_pad, e), jnp.float32),
        out_specs=pl.BlockSpec((tile, e), row),
        compiler_params=cp_par,
    )(y2, s2, ss2, g2, be2, w3, b3)

    if padded:
        out = out[:n]
    return out


# ----------------------------- params / reference -------------------------------------


def init_params(key, input_dim, entry_dim):
    """PyTorch-layout parameters (weights stored pre-transposed as (in, out))."""
    ks = jax.random.split(key, 6)

    def lin(kw, kb, fan_in, fan_out):
        bound = 1.0 / jnp.sqrt(fan_in)
        w = jax.random.uniform(kw, (fan_in, fan_out), jnp.float32, -bound, bound)
        b = jax.random.uniform(kb, (1, fan_out), jnp.float32, -bound, bound)
        return w, b

    w1, b1 = lin(ks[0], ks[1], input_dim, H1)
    w2, b2 = lin(ks[2], ks[3], H1, H2)
    w3, b3 = lin(ks[4], ks[5], H2, entry_dim)
    g1, be1 = jnp.ones((1, H1), jnp.float32), jnp.zeros((1, H1), jnp.float32)
    g2, be2 = jnp.ones((1, H2), jnp.float32), jnp.zeros((1, H2), jnp.float32)
    return (w1, b1, g1, be1, w2, b2, g2, be2, w3, b3)


def prepare_params(params):
    """One-time kernel layout prep: cast matmul weights to bf16 (no lane padding).

    b1/b2 are dropped: BatchNorm's batch-mean subtraction cancels them exactly.
    """
    w1, b1, g1, be1, w2, b2, g2, be2, w3, b3 = params
    return (w1.astype(jnp.bfloat16), g1, be1,
            w2.astype(jnp.bfloat16), g2, be2,
            w3.astype(jnp.bfloat16), b3)


def encoder_reference(x, params):
    """Pure-JAX mirror of the module math (bf16 MXU inputs, f32 acc, training-mode BN)."""
    w1, b1, g1, be1, w2, b2, g2, be2, w3, b3 = params

    def dot_bf16(a, b):
        return jnp.dot(a.astype(jnp.bfloat16), b.astype(jnp.bfloat16),
                       preferred_element_type=jnp.float32)

    def bn_relu(h, g, be):
        mu = jnp.mean(h, axis=0, keepdims=True)
        var = jnp.maximum(jnp.mean(h * h, axis=0, keepdims=True) - mu * mu, 0.0)
        scale = g * lax.rsqrt(var + EPS)
        shift = be - mu * scale
        return jnp.maximum(h * scale + shift, 0.0)

    h = bn_relu(dot_bf16(x, w1), g1, be1)          # b1 cancelled by BN mean
    h = bn_relu(dot_bf16(h, w2), g2, be2)          # b2 cancelled by BN mean
    return dot_bf16(h, w3) + b3


# ----------------------------- demo ----------------------------------------------------


if __name__ == "__main__":
    N, INPUT_DIM, ENTRY_DIM = 8, 32, 16

    key = jax.random.PRNGKey(0)
    kx, kp = jax.random.split(key)
    x = jax.random.normal(kx, (N, INPUT_DIM), jnp.float32)
    params = init_params(kp, INPUT_DIM, ENTRY_DIM)
    kparams = prepare_params(params)

    out = encoder_forward(x, kparams)
    out = jax.block_until_ready(out)
    assert out.shape == (N, ENTRY_DIM)

    ref = encoder_reference(x, params)
    # Tolerance covers bf16 MXU inputs plus the bf16-stored y2 intermediate; BN stats
    # and normalization math are f32.
    err = float(jnp.max(jnp.abs(out - ref)))
    assert jnp.allclose(out, ref, atol=2e-2, rtol=2e-2), f"mismatch vs reference: {err}"

    print("KERNEL_OK")
</pallas_src>

<mosaic_0001>
module attributes {stable_mosaic.version = 11 : i64} {
  func.func @_stats1_kernel(%arg0: i32, %arg1: memref<8x32xf32, #tpu.memory_space<vmem>>, %arg2: memref<32x512xbf16, #tpu.memory_space<vmem>>, %arg3: memref<1x512xf32, #tpu.memory_space<vmem>>, %arg4: memref<1x512xf32, #tpu.memory_space<vmem>>) attributes {dimension_semantics = [#tpu.dimension_semantics<arbitrary>], iteration_bounds = array<i64: 1>, scalar_prefetch = 0 : i64, scratch_operands = 0 : i64, tpu.core_type = #tpu.core_type<tc>, window_params = [{transform_indices = @transform_0, window_bounds = array<i64: 8, 32>}, {pipeline_mode = #tpu.pipeline_mode<synchronous>, transform_indices = @transform_1, window_bounds = array<i64: 32, 512>}, {pipeline_mode = #tpu.pipeline_mode<synchronous>, transform_indices = @transform_2, window_bounds = array<i64: 1, 512>}, {pipeline_mode = #tpu.pipeline_mode<synchronous>, transform_indices = @transform_3, window_bounds = array<i64: 1, 512>}]} {
    %c0 = arith.constant 0 : index
    %c0_0 = arith.constant 0 : index
    %0 = vector.load %arg1[%c0, %c0_0] : memref<8x32xf32, #tpu.memory_space<vmem>>, vector<8x32xf32>
    %1 = arith.truncf %0 : vector<8x32xf32> to vector<8x32xbf16>
    %c0_1 = arith.constant 0 : index
    %c0_2 = arith.constant 0 : index
    %2 = vector.load %arg2[%c0_1, %c0_2] : memref<32x512xbf16, #tpu.memory_space<vmem>>, vector<32x512xbf16>
    %cst = arith.constant dense<0.000000e+00> : vector<8x512xf32>
    %3 = tpu.matmul %1, %2, %cst {dimension_numbers = #tpu.dot_dimension_numbers<[1], [0], [0], [1], [0, 0, 1, 1], [], []>} : vector<8x32xbf16>, vector<32x512xbf16>, vector<8x512xf32> -> vector<8x512xf32>
    %c0_i32 = arith.constant 0 : i32
    %4 = arith.cmpi eq, %arg0, %c0_i32 : i32
    %5 = arith.extui %4 : i1 to i32
    %c0_i32_3 = arith.constant 0 : i32
    %6 = arith.cmpi ne, %5, %c0_i32_3 : i32
    scf.if %6 {
      %cst_14 = arith.constant 0.000000e+00 : f32
      %18 = vector.broadcast %cst_14 : f32 to vector<1x512xf32>
      %c0_15 = arith.constant 0 : index
      %c0_16 = arith.constant 0 : index
      %19 = vector.load %arg3[%c0_15, %c0_16] : memref<1x512xf32, #tpu.memory_space<vmem>>, vector<1x512xf32>
      tpu.vector_store %arg3[%c0_15, %c0_16], %18 {strides = array<i32>} : memref<1x512xf32, #tpu.memory_space<vmem>>, vector<1x512xf32>,
      %cst_17 = arith.constant 0.000000e+00 : f32
      %20 = vector.broadcast %cst_17 : f32 to vector<1x512xf32>
      %c0_18 = arith.constant 0 : index
      %c0_19 = arith.constant 0 : index
      %21 = vector.load %arg4[%c0_18, %c0_19] : memref<1x512xf32, #tpu.memory_space<vmem>>, vector<1x512xf32>
      tpu.vector_store %arg4[%c0_18, %c0_19], %20 {strides = array<i32>} : memref<1x512xf32, #tpu.memory_space<vmem>>, vector<1x512xf32>,
    } else {
    }
    %c0_4 = arith.constant 0 : index
    %c0_5 = arith.constant 0 : index
    %7 = vector.load %arg3[%c0_4, %c0_5] : memref<1x512xf32, #tpu.memory_space<vmem>>, vector<1x512xf32>
    %cst_6 = arith.constant dense<0.000000e+00> : vector<512xf32>
    %8 = vector.multi_reduction <add>, %3, %cst_6 [0] : vector<8x512xf32> to vector<512xf32>
    %9 = vector.shape_cast %8 : vector<512xf32> to vector<1x512xf32>
    %10 = arith.addf %7, %9 : vector<1x512xf32>
    %c0_7 = arith.constant 0 : index
    %c0_8 = arith.constant 0 : index
    %11 = vector.load %arg3[%c0_7, %c0_8] : memref<1x512xf32, #tpu.memory_space<vmem>>, vector<1x512xf32>
    tpu.vector_store %arg3[%c0_7, %c0_8], %10 {strides = array<i32>} : memref<1x512xf32, #tpu.memory_space<vmem>>, vector<1x512xf32>,
    %c0_9 = arith.constant 0 : index
    %c0_10 = arith.constant 0 : index
    %12 = vector.load %arg4[%c0_9, %c0_10] : memref<1x512xf32, #tpu.memory_space<vmem>>, vector<1x512xf32>
    %13 = arith.mulf %3, %3 : vector<8x512xf32>
    %cst_11 = arith.constant dense<0.000000e+00> : vector<512xf32>
    %14 = vector.multi_reduction <add>, %13, %cst_11 [0] : vector<8x512xf32> to vector<512xf32>
    %15 = vector.shape_cast %14 : vector<512xf32> to vector<1x512xf32>
    %16 = arith.addf %12, %15 : vector<1x512xf32>
    %c0_12 = arith.constant 0 : index
    %c0_13 = arith.constant 0 : index
    %17 = vector.load %arg4[%c0_12, %c0_13] : memref<1x512xf32, #tpu.memory_space<vmem>>, vector<1x512xf32>
    tpu.vector_store %arg4[%c0_12, %c0_13], %16 {strides = array<i32>} : memref<1x512xf32, #tpu.memory_space<vmem>>, vector<1x512xf32>,
    return
  }
  func.func @transform_0(%arg0: i32) -> (i32, i32) {
    %c0_i32 = arith.constant 0 : i32
    %c0_i32_0 = arith.constant 0 : i32
    return %arg0, %c0_i32 : i32, i32
  }
  func.func @transform_1(%arg0: i32) -> (i32, i32) {
    %c0_i32 = arith.constant 0 : i32
    %c0_i32_0 = arith.constant 0 : i32
    %c0_i32_1 = arith.constant 0 : i32
    return %c0_i32, %c0_i32_0 : i32, i32
  }
  func.func @transform_2(%arg0: i32) -> (i32, i32) {
    %c0_i32 = arith.constant 0 : i32
    %c0_i32_0 = arith.constant 0 : i32
    %c0_i32_1 = arith.constant 0 : i32
    return %c0_i32, %c0_i32_0 : i32, i32
  }
  func.func @transform_3(%arg0: i32) -> (i32, i32) {
    %c0_i32 = arith.constant 0 : i32
    %c0_i32_0 = arith.constant 0 : i32
    %c0_i32_1 = arith.constant 0 : i32
    return %c0_i32, %c0_i32_0 : i32, i32
  }
}

module attributes {stable_mosaic.version = 11 : i64} {
  func.func @_layer3_kernel(%arg0: i32, %arg1: memref<8x128xbf16, #tpu.memory_space<vmem>>, %arg2: memref<1x128xf32, #tpu.memory_space<vmem>>, %arg3: memref<1x128xf32, #tpu.memory_space<vmem>>, %arg4: memref<1x128xf32, #tpu.memory_space<vmem>>, %arg5: memref<1x128xf32, #tpu.memory_space<vmem>>, %arg6: memref<128x16xbf16, #tpu.memory_space<vmem>>, %arg7: memref<1x16xf32, #tpu.memory_space<vmem>>, %arg8: memref<8x16xf32, #tpu.memory_space<vmem>>) attributes {dimension_semantics = [#tpu.dimension_semantics<parallel>], iteration_bounds = array<i64: 1>, scalar_prefetch = 0 : i64, scratch_operands = 0 : i64, tpu.core_type = #tpu.core_type<tc>, window_params = [{transform_indices = @transform_0, window_bounds = array<i64: 8, 128>}, {pipeline_mode = #tpu.pipeline_mode<synchronous>, transform_indices = @transform_1, window_bounds = array<i64: 1, 128>}, {pipeline_mode = #tpu.pipeline_mode<synchronous>, transform_indices = @transform_2, window_bounds = array<i64: 1, 128>}, {pipeline_mode = #tpu.pipeline_mode<synchronous>, transform_indices = @transform_3, window_bounds = array<i64: 1, 128>}, {pipeline_mode = #tpu.pipeline_mode<synchronous>, transform_indices = @transform_4, window_bounds = array<i64: 1, 128>}, {pipeline_mode = #tpu.pipeline_mode<synchronous>, transform_indices = @transform_5, window_bounds = array<i64: 128, 16>}, {pipeline_mode = #tpu.pipeline_mode<synchronous>, transform_indices = @transform_6, window_bounds = array<i64: 1, 16>}, {transform_indices = @transform_7, window_bounds = array<i64: 8, 16>}]} {
    %c0 = arith.constant 0 : index
    %c0_0 = arith.constant 0 : index
    %0 = vector.load %arg2[%c0, %c0_0] : memref<1x128xf32, #tpu.memory_space<vmem>>, vector<1x128xf32>
    %cst = arith.constant 1.250000e-01 : f32
    %1 = vector.broadcast %cst : f32 to vector<1x128xf32>
    %2 = arith.mulf %0, %1 : vector<1x128xf32>
    %c0_1 = arith.constant 0 : index
    %c0_2 = arith.constant 0 : index
    %3 = vector.load %arg3[%c0_1, %c0_2] : memref<1x128xf32, #tpu.memory_space<vmem>>, vector<1x128xf32>
    %cst_3 = arith.constant 1.250000e-01 : f32
    %4 = vector.broadcast %cst_3 : f32 to vector<1x128xf32>
    %5 = arith.mulf %3, %4 : vector<1x128xf32>
    %6 = arith.mulf %2, %2 : vector<1x128xf32>
    %7 = arith.subf %5, %6 : vector<1x128xf32>
    %cst_4 = arith.constant 0.000000e+00 : f32
    %8 = vector.broadcast %cst_4 : f32 to vector<1x128xf32>
    %9 = arith.maximumf %7, %8 : vector<1x128xf32>
    %c0_5 = arith.constant 0 : index
    %c0_6 = arith.constant 0 : index
    %10 = vector.load %arg4[%c0_5, %c0_6] : memref<1x128xf32, #tpu.memory_space<vmem>>, vector<1x128xf32>
    %cst_7 = arith.constant 9.99999974E-6 : f32
    %11 = vector.broadcast %cst_7 : f32 to vector<1x128xf32>
    %12 = arith.addf %9, %11 : vector<1x128xf32>
    %13 = math.rsqrt %12 : vector<1x128xf32>
    %14 = arith.mulf %10, %13 : vector<1x128xf32>
    %c0_8 = arith.constant 0 : index
    %c0_9 = arith.constant 0 : index
    %15 = vector.load %arg5[%c0_8, %c0_9] : memref<1x128xf32, #tpu.memory_space<vmem>>, vector<1x128xf32>
    %16 = arith.mulf %2, %14 : vector<1x128xf32>
    %17 = arith.subf %15, %16 : vector<1x128xf32>
    %c0_10 = arith.constant 0 : index
    %c0_11 = arith.constant 0 : index
    %18 = vector.load %arg1[%c0_10, %c0_11] : memref<8x128xbf16, #tpu.memory_space<vmem>>, vector<8x128xbf16>
    %19 = arith.extf %18 : vector<8x128xbf16> to vector<8x128xf32>
    %20 = vector.broadcast %14 : vector<1x128xf32> to vector<8x128xf32>
    %21 = arith.mulf %19, %20 : vector<8x128xf32>
    %22 = vector.broadcast %17 : vector<1x128xf32> to vector<8x128xf32>
    %23 = arith.addf %21, %22 : vector<8x128xf32>
    %cst_12 = arith.constant 0.000000e+00 : f32
    %24 = vector.broadcast %cst_12 : f32 to vector<8x128xf32>
    %25 = arith.maximumf %23, %24 : vector<8x128xf32>
    %26 = arith.truncf %25 : vector<8x128xf32> to vector<8x128xbf16>
    %c0_13 = arith.constant 0 : index
    %c0_14 = arith.constant 0 : index
    %27 = vector.load %arg6[%c0_13, %c0_14] : memref<128x16xbf16, #tpu.memory_space<vmem>>, vector<128x16xbf16>
    %cst_15 = arith.constant dense<0.000000e+00> : vector<8x16xf32>
    %28 = tpu.matmul %26, %27, %cst_15 {dimension_numbers = #tpu.dot_dimension_numbers<[1], [0], [0], [1], [0, 0, 1, 1], [], []>} : vector<8x128xbf16>, vector<128x16xbf16>, vector<8x16xf32> -> vector<8x16xf32>
    %c0_16 = arith.constant 0 : index
    %c0_17 = arith.constant 0 : index
    %29 = vector.load %arg7[%c0_16, %c0_17] : memref<1x16xf32, #tpu.memory_space<vmem>>, vector<1x16xf32>
    %30 = vector.broadcast %29 : vector<1x16xf32> to vector<8x16xf32>
    %31 = arith.addf %28, %30 : vector<8x16xf32>
    %c0_18 = arith.constant 0 : index
    %c0_19 = arith.constant 0 : index
    %32 = vector.load %arg8[%c0_18, %c0_19] : memref<8x16xf32, #tpu.memory_space<vmem>>, vector<8x16xf32>
    tpu.vector_store %arg8[%c0_18, %c0_19], %31 {strides = array<i32>} : memref<8x16xf32, #tpu.memory_space<vmem>>, vector<8x16xf32>,
    return
  }
  func.func @transform_0(%arg0: i32) -> (i32, i32) {
    %c0_i32 = arith.constant 0 : i32
    %c0_i32_0 = arith.constant 0 : i32
    return %arg0, %c0_i32 : i32, i32
  }
  func.func @transform_1(%arg0: i32) -> (i32, i32) {
    %c0_i32 = arith.constant 0 : i32
    %c0_i32_0 = arith.constant 0 : i32
    %c0_i32_1 = arith.constant 0 : i32
    return %c0_i32, %c0_i32_0 : i32, i32
  }
  func.func @transform_2(%arg0: i32) -> (i32, i32) {
    %c0_i32 = arith.constant 0 : i32
    %c0_i32_0 = arith.constant 0 : i32
    %c0_i32_1 = arith.constant 0 : i32
    return %c0_i32, %c0_i32_0 : i32, i32
  }
  func.func @transform_3(%arg0: i32) -> (i32, i32) {
    %c0_i32 = arith.constant 0 : i32
    %c0_i32_0 = arith.constant 0 : i32
    %c0_i32_1 = arith.constant 0 : i32
    return %c0_i32, %c0_i32_0 : i32, i32
  }
  func.func @transform_4(%arg0: i32) -> (i32, i32) {
    %c0_i32 = arith.constant 0 : i32
    %c0_i32_0 = arith.constant 0 : i32
    %c0_i32_1 = arith.constant 0 : i32
    return %c0_i32, %c0_i32_0 : i32, i32
  }
  func.func @transform_5(%arg0: i32) -> (i32, i32) {
    %c0_i32 = arith.constant 0 : i32
    %c0_i32_0 = arith.constant 0 : i32
    %c0_i32_1 = arith.constant 0 : i32
    return %c0_i32, %c0_i32_0 : i32, i32
  }
  func.func @transform_6(%arg0: i32) -> (i32, i32) {
    %c0_i32 = arith.constant 0 : i32
    %c0_i32_0 = arith.constant 0 : i32
    %c0_i32_1 = arith.constant 0 : i32
    return %c0_i32, %c0_i32_0 : i32, i32
  }
  func.func @transform_7(%arg0: i32) -> (i32, i32) {
    %c0_i32 = arith.constant 0 : i32
    %c0_i32_0 = arith.constant 0 : i32
    return %arg0, %c0_i32 : i32, i32
  }
}

module attributes {stable_mosaic.version = 11 : i64} {
  func.func @_layer2_kernel(%arg0: i32, %arg1: memref<8x32xf32, #tpu.memory_space<vmem>>, %arg2: memref<32x512xbf16, #tpu.memory_space<vmem>>, %arg3: memref<1x512xf32, #tpu.memory_space<vmem>>, %arg4: memref<1x512xf32, #tpu.memory_space<vmem>>, %arg5: memref<1x512xf32, #tpu.memory_space<vmem>>, %arg6: memref<1x512xf32, #tpu.memory_space<vmem>>, %arg7: memref<512x128xbf16, #tpu.memory_space<vmem>>, %arg8: memref<8x128xbf16, #tpu.memory_space<vmem>>, %arg9: memref<1x128xf32, #tpu.memory_space<vmem>>, %arg10: memref<1x128xf32, #tpu.memory_space<vmem>>) attributes {dimension_semantics = [#tpu.dimension_semantics<arbitrary>], iteration_bounds = array<i64: 1>, scalar_prefetch = 0 : i64, scratch_operands = 0 : i64, tpu.core_type = #tpu.core_type<tc>, window_params = [{transform_indices = @transform_0, window_bounds = array<i64: 8, 32>}, {pipeline_mode = #tpu.pipeline_mode<synchronous>, transform_indices = @transform_1, window_bounds = array<i64: 32, 512>}, {pipeline_mode = #tpu.pipeline_mode<synchronous>, transform_indices = @transform_2, window_bounds = array<i64: 1, 512>}, {pipeline_mode = #tpu.pipeline_mode<synchronous>, transform_indices = @transform_3, window_bounds = array<i64: 1, 512>}, {pipeline_mode = #tpu.pipeline_mode<synchronous>, transform_indices = @transform_4, window_bounds = array<i64: 1, 512>}, {pipeline_mode = #tpu.pipeline_mode<synchronous>, transform_indices = @transform_5, window_bounds = array<i64: 1, 512>}, {pipeline_mode = #tpu.pipeline_mode<synchronous>, transform_indices = @transform_6, window_bounds = array<i64: 512, 128>}, {transform_indices = @transform_7, window_bounds = array<i64: 8, 128>}, {pipeline_mode = #tpu.pipeline_mode<synchronous>, transform_indices = @transform_8, window_bounds = array<i64: 1, 128>}, {pipeline_mode = #tpu.pipeline_mode<synchronous>, transform_indices = @transform_9, window_bounds = array<i64: 1, 128>}]} {
    %c0 = arith.constant 0 : index
    %c0_0 = arith.constant 0 : index
    %0 = vector.load %arg1[%c0, %c0_0] : memref<8x32xf32, #tpu.memory_space<vmem>>, vector<8x32xf32>
    %1 = arith.truncf %0 : vector<8x32xf32> to vector<8x32xbf16>
    %c0_1 = arith.constant 0 : index
    %c0_2 = arith.constant 0 : index
    %2 = vector.load %arg2[%c0_1, %c0_2] : memref<32x512xbf16, #tpu.memory_space<vmem>>, vector<32x512xbf16>
    %cst = arith.constant dense<0.000000e+00> : vector<8x512xf32>
    %3 = tpu.matmul %1, %2, %cst {dimension_numbers = #tpu.dot_dimension_numbers<[1], [0], [0], [1], [0, 0, 1, 1], [], []>} : vector<8x32xbf16>, vector<32x512xbf16>, vector<8x512xf32> -> vector<8x512xf32>
    %c0_3 = arith.constant 0 : index
    %c0_4 = arith.constant 0 : index
    %4 = vector.load %arg3[%c0_3, %c0_4] : memref<1x512xf32, #tpu.memory_space<vmem>>, vector<1x512xf32>
    %cst_5 = arith.constant 1.250000e-01 : f32
    %5 = vector.broadcast %cst_5 : f32 to vector<1x512xf32>
    %6 = arith.mulf %4, %5 : vector<1x512xf32>
    %c0_6 = arith.constant 0 : index
    %c0_7 = arith.constant 0 : index
    %7 = vector.load %arg4[%c0_6, %c0_7] : memref<1x512xf32, #tpu.memory_space<vmem>>, vector<1x512xf32>
    %cst_8 = arith.constant 1.250000e-01 : f32
    %8 = vector.broadcast %cst_8 : f32 to vector<1x512xf32>
    %9 = arith.mulf %7, %8 : vector<1x512xf32>
    %10 = arith.mulf %6, %6 : vector<1x512xf32>
    %11 = arith.subf %9, %10 : vector<1x512xf32>
    %cst_9 = arith.constant 0.000000e+00 : f32
    %12 = vector.broadcast %cst_9 : f32 to vector<1x512xf32>
    %13 = arith.maximumf %11, %12 : vector<1x512xf32>
    %c0_10 = arith.constant 0 : index
    %c0_11 = arith.constant 0 : index
    %14 = vector.load %arg5[%c0_10, %c0_11] : memref<1x512xf32, #tpu.memory_space<vmem>>, vector<1x512xf32>
    %cst_12 = arith.constant 9.99999974E-6 : f32
    %15 = vector.broadcast %cst_12 : f32 to vector<1x512xf32>
    %16 = arith.addf %13, %15 : vector<1x512xf32>
    %17 = math.rsqrt %16 : vector<1x512xf32>
    %18 = arith.mulf %14, %17 : vector<1x512xf32>
    %c0_13 = arith.constant 0 : index
    %c0_14 = arith.constant 0 : index
    %19 = vector.load %arg6[%c0_13, %c0_14] : memref<1x512xf32, #tpu.memory_space<vmem>>, vector<1x512xf32>
    %20 = arith.mulf %6, %18 : vector<1x512xf32>
    %21 = arith.subf %19, %20 : vector<1x512xf32>
    %22 = vector.broadcast %18 : vector<1x512xf32> to vector<8x512xf32>
    %23 = arith.mulf %3, %22 : vector<8x512xf32>
    %24 = vector.broadcast %21 : vector<1x512xf32> to vector<8x512xf32>
    %25 = arith.addf %23, %24 : vector<8x512xf32>
    %cst_15 = arith.constant 0.000000e+00 : f32
    %26 = vector.broadcast %cst_15 : f32 to vector<8x512xf32>
    %27 = arith.maximumf %25, %26 : vector<8x512xf32>
    %28 = arith.truncf %27 : vector<8x512xf32> to vector<8x512xbf16>
    %c0_16 = arith.constant 0 : index
    %c0_17 = arith.constant 0 : index
    %29 = vector.load %arg7[%c0_16, %c0_17] : memref<512x128xbf16, #tpu.memory_space<vmem>>, vector<512x128xbf16>
    %cst_18 = arith.constant dense<0.000000e+00> : vector<8x128xf32>
    %30 = tpu.matmul %28, %29, %cst_18 {dimension_numbers = #tpu.dot_dimension_numbers<[1], [0], [0], [1], [0, 0, 1, 1], [], []>} : vector<8x512xbf16>, vector<512x128xbf16>, vector<8x128xf32> -> vector<8x128xf32>
    %31 = arith.truncf %30 : vector<8x128xf32> to vector<8x128xbf16>
    %c0_19 = arith.constant 0 : index
    %c0_20 = arith.constant 0 : index
    %32 = vector.load %arg8[%c0_19, %c0_20] : memref<8x128xbf16, #tpu.memory_space<vmem>>, vector<8x128xbf16>
    tpu.vector_store %arg8[%c0_19, %c0_20], %31 {strides = array<i32>} : memref<8x128xbf16, #tpu.memory_space<vmem>>, vector<8x128xbf16>,
    %c0_i32 = arith.constant 0 : i32
    %33 = arith.cmpi eq, %arg0, %c0_i32 : i32
    %34 = arith.extui %33 : i1 to i32
    %c0_i32_21 = arith.constant 0 : i32
    %35 = arith.cmpi ne, %34, %c0_i32_21 : i32
    scf.if %35 {
      %cst_32 = arith.constant 0.000000e+00 : f32
      %47 = vector.broadcast %cst_32 : f32 to vector<1x128xf32>
      %c0_33 = arith.constant 0 : index
      %c0_34 = arith.constant 0 : index
      %48 = vector.load %arg9[%c0_33, %c0_34] : memref<1x128xf32, #tpu.memory_space<vmem>>, vector<1x128xf32>
      tpu.vector_store %arg9[%c0_33, %c0_34], %47 {strides = array<i32>} : memref<1x128xf32, #tpu.memory_space<vmem>>, vector<1x128xf32>,
      %cst_35 = arith.constant 0.000000e+00 : f32
      %49 = vector.broadcast %cst_35 : f32 to vector<1x128xf32>
      %c0_36 = arith.constant 0 : index
      %c0_37 = arith.constant 0 : index
      %50 = vector.load %arg10[%c0_36, %c0_37] : memref<1x128xf32, #tpu.memory_space<vmem>>, vector<1x128xf32>
      tpu.vector_store %arg10[%c0_36, %c0_37], %49 {strides = array<i32>} : memref<1x128xf32, #tpu.memory_space<vmem>>, vector<1x128xf32>,
    } else {
    }
    %c0_22 = arith.constant 0 : index
    %c0_23 = arith.constant 0 : index
    %36 = vector.load %arg9[%c0_22, %c0_23] : memref<1x128xf32, #tpu.memory_space<vmem>>, vector<1x128xf32>
    %cst_24 = arith.constant dense<0.000000e+00> : vector<128xf32>
    %37 = vector.multi_reduction <add>, %30, %cst_24 [0] : vector<8x128xf32> to vector<128xf32>
    %38 = vector.shape_cast %37 : vector<128xf32> to vector<1x128xf32>
    %39 = arith.addf %36, %38 : vector<1x128xf32>
    %c0_25 = arith.constant 0 : index
    %c0_26 = arith.constant 0 : index
    %40 = vector.load %arg9[%c0_25, %c0_26] : memref<1x128xf32, #tpu.memory_space<vmem>>, vector<1x128xf32>
    tpu.vector_store %arg9[%c0_25, %c0_26], %39 {strides = array<i32>} : memref<1x128xf32, #tpu.memory_space<vmem>>, vector<1x128xf32>,
    %c0_27 = arith.constant 0 : index
    %c0_28 = arith.constant 0 : index
    %41 = vector.load %arg10[%c0_27, %c0_28] : memref<1x128xf32, #tpu.memory_space<vmem>>, vector<1x128xf32>
    %42 = arith.mulf %30, %30 : vector<8x128xf32>
    %cst_29 = arith.constant dense<0.000000e+00> : vector<128xf32>
    %43 = vector.multi_reduction <add>, %42, %cst_29 [0] : vector<8x128xf32> to vector<128xf32>
    %44 = vector.shape_cast %43 : vector<128xf32> to vector<1x128xf32>
    %45 = arith.addf %41, %44 : vector<1x128xf32>
    %c0_30 = arith.constant 0 : index
    %c0_31 = arith.constant 0 : index
    %46 = vector.load %arg10[%c0_30, %c0_31] : memref<1x128xf32, #tpu.memory_space<vmem>>, vector<1x128xf32>
    tpu.vector_store %arg10[%c0_30, %c0_31], %45 {strides = array<i32>} : memref<1x128xf32, #tpu.memory_space<vmem>>, vector<1x128xf32>,
    return
  }
  func.func @transform_0(%arg0: i32) -> (i32, i32) {
    %c0_i32 = arith.constant 0 : i32
    %c0_i32_0 = arith.constant 0 : i32
    return %arg0, %c0_i32 : i32, i32
  }
  func.func @transform_1(%arg0: i32) -> (i32, i32) {
    %c0_i32 = arith.constant 0 : i32
    %c0_i32_0 = arith.constant 0 : i32
    %c0_i32_1 = arith.constant 0 : i32
    return %c0_i32, %c0_i32_0 : i32, i32
  }
  func.func @transform_2(%arg0: i32) -> (i32, i32) {
    %c0_i32 = arith.constant 0 : i32
    %c0_i32_0 = arith.constant 0 : i32
    %c0_i32_1 = arith.constant 0 : i32
    return %c0_i32, %c0_i32_0 : i32, i32
  }
  func.func @transform_3(%arg0: i32) -> (i32, i32) {
    %c0_i32 = arith.constant 0 : i32
    %c0_i32_0 = arith.constant 0 : i32
    %c0_i32_1 = arith.constant 0 : i32
    return %c0_i32, %c0_i32_0 : i32, i32
  }
  func.func @transform_4(%arg0: i32) -> (i32, i32) {
    %c0_i32 = arith.constant 0 : i32
    %c0_i32_0 = arith.constant 0 : i32
    %c0_i32_1 = arith.constant 0 : i32
    return %c0_i32, %c0_i32_0 : i32, i32
  }
  func.func @transform_5(%arg0: i32) -> (i32, i32) {
    %c0_i32 = arith.constant 0 : i32
    %c0_i32_0 = arith.constant 0 : i32
    %c0_i32_1 = arith.constant 0 : i32
    return %c0_i32, %c0_i32_0 : i32, i32
  }
  func.func @transform_6(%arg0: i32) -> (i32, i32) {
    %c0_i32 = arith.constant 0 : i32
    %c0_i32_0 = arith.constant 0 : i32
    %c0_i32_1 = arith.constant 0 : i32
    return %c0_i32, %c0_i32_0 : i32, i32
  }
  func.func @transform_7(%arg0: i32) -> (i32, i32) {
    %c0_i32 = arith.constant 0 : i32
    %c0_i32_0 = arith.constant 0 : i32
    return %arg0, %c0_i32 : i32, i32
  }
  func.func @transform_8(%arg0: i32) -> (i32, i32) {
    %c0_i32 = arith.constant 0 : i32
    %c0_i32_0 = arith.constant 0 : i32
    %c0_i32_1 = arith.constant 0 : i32
    return %c0_i32, %c0_i32_0 : i32, i32
  }
  func.func @transform_9(%arg0: i32) -> (i32, i32) {
    %c0_i32 = arith.constant 0 : i32
    %c0_i32_0 = arith.constant 0 : i32
    %c0_i32_1 = arith.constant 0 : i32
    return %c0_i32, %c0_i32_0 : i32, i32
  }
}

</mosaic_0001>

<llo_original>
// kernel: encoder_forward.5
$region0: #{encoder_forward.5}
  #allocation0 [shape = 'u32[]', space=smem, size = 0x4, offset = 0x4, fixed_abs, tag = 'smem constant byte address 0x4 - core index']
  #allocation1 [shape = 'u32[72,128]{1,0:T(1,128)}', space=vmem, size = 0x9000, scoped, tag = 'internal scratch']
  %s0 = inlined_call_operand.vmem [shape: bf16[8,128], index: 0, kind: input, shape index: {}]
  %s1 = inlined_call_operand.vmem [shape: f32[1,128], index: 1, kind: input, shape index: {}]
  %s2 = inlined_call_operand.vmem [shape: f32[1,128], index: 2, kind: input, shape index: {}]
  %s3 = inlined_call_operand.vmem [shape: f32[1,128], index: 3, kind: input, shape index: {}]
  %s4 = inlined_call_operand.vmem [shape: f32[1,128], index: 4, kind: input, shape index: {}]
  %s5 = inlined_call_operand.vmem [shape: bf16[128,16], index: 5, kind: input, shape index: {}]
  %s6 = inlined_call_operand.vmem [shape: f32[1,16], index: 6, kind: input, shape index: {}]
  %s7 = inlined_call_operand.hbm [shape: f32[8,16], index: 7, kind: output, shape index: {}]
  %s8 = sld [smem:[#allocation0]]
  $region38: #{encoder_forward.5} parent=0
    _
  %s10 = ssub.s32 1, %s8
  %s11 = scalar_select 0, %s10, %s8
  $region1: #{encoder_forward.5} parent=0
    #allocation2 [shape = 'u8[4096]{0}', space=vmem, size = 0x1000, scoped, tag = 'output window, operand 0, single buffered']
    #allocation3 [shape = 's32[1]{0}', space=sflag, size = 0x4, scoped, tag = 'scoped memory for encoder_forward.5']
    %12 = vsyncpa [#allocation3], 0
    // Predicated region
    $region2: #{encoder_forward.5} parent=1 // pred_check
      _
    $region3: #{encoder_forward.5} parent=1 // pred_check_branch
      %14 = sbr.rel (0) target = $region5
    $region4: #{encoder_forward.5} parent=1 // pred_region
      _
    $region5: #{encoder_forward.5} parent=1 // pred_fallthru
      _
    // Predicated region
    $region6: #{encoder_forward.5} parent=1 // pred_check
      _
    $region7: #{encoder_forward.5} parent=1 // pred_check_branch
      %16 = sbr.rel (0) target = $region9
    $region8: #{encoder_forward.5} parent=1 // pred_region
      _
    $region9: #{encoder_forward.5} parent=1 // pred_fallthru
      _
    // Predicated region
    $region10: #{encoder_forward.5} parent=1 // pred_check
      _
    $region11: #{encoder_forward.5} parent=1 // pred_check_branch
      %18 = sbr.rel (0) target = $region13
    $region12: #{encoder_forward.5} parent=1 // pred_region
      _
    $region13: #{encoder_forward.5} parent=1 // pred_fallthru
      _
    // Predicated region
    $region14: #{encoder_forward.5} parent=1 // pred_check
      _
    $region15: #{encoder_forward.5} parent=1 // pred_check_branch
      %20 = sbr.rel (0) target = $region17
    $region16: #{encoder_forward.5} parent=1 // pred_region
      _
    $region17: #{encoder_forward.5} parent=1 // pred_fallthru
      _
    // Predicated region
    $region18: #{encoder_forward.5} parent=1 // pred_check
      _
    $region19: #{encoder_forward.5} parent=1 // pred_check_branch
      %22 = sbr.rel (0) target = $region21
    $region20: #{encoder_forward.5} parent=1 // pred_region
      _
    $region21: #{encoder_forward.5} parent=1 // pred_fallthru
      _
    // Predicated region
    $region22: #{encoder_forward.5} parent=1 // pred_check
      _
    $region23: #{encoder_forward.5} parent=1 // pred_check_branch
      %24 = sbr.rel (0) target = $region25
    $region24: #{encoder_forward.5} parent=1 // pred_region
      _
    $region25: #{encoder_forward.5} parent=1 // pred_fallthru
      _
    // Predicated region
    $region26: #{encoder_forward.5} parent=1 // pred_check
      _
    $region27: #{encoder_forward.5} parent=1 // pred_check_branch
      %26 = sbr.rel (0) target = $region29
    $region28: #{encoder_forward.5} parent=1 // pred_region
      _
    $region29: #{encoder_forward.5} parent=1 // pred_fallthru
      _
    %v27 = vld [vmem:[%s1] sm:$0x1]
    %v28 = vmul.f32 %v27, 0.125
    %v29 = vld [vmem:[%s2] sm:$0x1]
    %v30 = vmul.f32 %v29, 0.125
    %v31 = vmul.f32 %v28, %v28
    %v32 = vsub.f32 %v30, %v31
    %v33 = vmax.f32 %v32, 0.0
    %v34 = vld [vmem:[%s3] sm:$0x1]
    %v35 = vadd.f32 %v33, 1e-05
    %v36 = vrsqrt.pop %v35
    %v37 = vmul.f32 %v36, %v35
    %v38 = vmul.f32 %v37, %v36
    %v39 = vmul.f32 0.5, %v38
    %v40 = vsub.f32 1.5, %v39
    %v41 = vmul.f32 %v36, %v40
    %vm42 = vweird.f32 %v35
    %vm43 = vweird.f32 %v36
    %vm44 = vmor %vm42, %vm43
    %v45 = vsel %vm44, %v36, %v41
    %v46 = vmul.f32 %v34, %v45
    %v47 = vld [vmem:[%s4] sm:$0x1]
    %v48 = vmul.f32 %v28, %v46
    %v49 = vsub.f32 %v47, %v48
    %v50 = vld [vmem:[%s0] sm:$0xf]
    %v51 = vunpack.c.l.bf16 %v50
    %v53 = vperm.slane %v46, 0
    %v55 = vmul.f32 %v51, %v53
    %v57 = vperm.slane %v49, 0
    %v59 = vadd.f32 %v55, %v57
    %v60 = vmax.f32 %v59, 0.0
    %v61 = vpack.c.bf16 %v60, %v60
    %v62 = vld [vmem:[%s5] sm:$0xf]
    %v63 = vld [vmem:[%s5 + $0x4] sm:$0xf]
    %v64 = vld [vmem:[%s5 + $0x8] sm:$0xf]
    %v65 = vld [vmem:[%s5 + $0xc] sm:$0xf]
    %v66 = vld [vmem:[%s5 + $0x10] sm:$0xf]
    %v67 = vld [vmem:[%s5 + $0x14] sm:$0xf]
    %v68 = vld [vmem:[%s5 + $0x18] sm:$0xf]
    %v69 = vld [vmem:[%s5 + $0x1c] sm:$0xf]
    %v70 = vld [vmem:[%s5 + $0x20] sm:$0xf]
    %v71 = vld [vmem:[%s5 + $0x24] sm:$0xf]
    %v72 = vld [vmem:[%s5 + $0x28] sm:$0xf]
    %v73 = vld [vmem:[%s5 + $0x2c] sm:$0xf]
    %v74 = vld [vmem:[%s5 + $0x30] sm:$0xf]
    %v75 = vld [vmem:[%s5 + $0x34] sm:$0xf]
    %v76 = vld [vmem:[%s5 + $0x38] sm:$0xf]
    %v77 = vld [vmem:[%s5 + $0x3c] sm:$0xf]
    %v78 = vld [vmem:[%s6] sm:$0x1]
    %v80 = vperm.slane %v78, 0
    %v98 = vunpack.c.l.b16 %v62
    %v99 = vunpack.c.l.b16 %v63
    %v100 = vunpack.c.l.b16 %v64
    %v101 = vunpack.c.l.b16 %v65
    %v102 = vunpack.c.l.b16 %v66
    %v103 = vunpack.c.l.b16 %v67
    %v104 = vunpack.c.l.b16 %v68
    %v105 = vunpack.c.l.b16 %v69
    %v106 = vunpack.c.l.b16 %v70
    %v107 = vunpack.c.l.b16 %v71
    %v108 = vunpack.c.l.b16 %v72
    %v109 = vunpack.c.l.b16 %v73
    %v110 = vunpack.c.l.b16 %v74
    %v111 = vunpack.c.l.b16 %v75
    %v112 = vunpack.c.l.b16 %v76
    %v113 = vunpack.c.l.b16 %v77
    %v114 = vpack.c.b16 %v99, %v98
    %v115 = vpack.c.b16 %v101, %v100
    %v116 = vpack.c.b16 %v103, %v102
    %v117 = vpack.c.b16 %v105, %v104
    %v118 = vpack.c.b16 %v107, %v106
    %v119 = vpack.c.b16 %v109, %v108
    %v120 = vpack.c.b16 %v111, %v110
    %v121 = vpack.c.b16 %v113, %v112
    %130 = vmatpush.bf16.msra.mxu0 %v121
    %131 = vmatpush.bf16.msra.mxu0 %v120
    %132 = vmatpush.bf16.msra.mxu0 %v119
    %133 = vmatpush.bf16.msra.mxu0 %v118
    %134 = vmatpush.bf16.msra.mxu0 %v117
    %135 = vmatpush.bf16.msra.mxu0 %v116
    %136 = vmatpush.bf16.msra.mxu0 %v115
    %137 = vmatpush.bf16.msra.mxu0 %v114
    %138 = vmatmul.bf16.gmra.mxu0 %v61
    %v139 = vpop.f32.mrf.mxu0
    %v140 = vadd.f32 %v80, %v139
    %v141 = vpop.f32.mrf.mxu0
    %142 = vdwg.mxu0
    %vm143 = vcmask 130048
    %144 = vst.msk [vmem:[#allocation2] sm:$0xff] %vm143, %v140
    // Predicated region
    $region30: #{encoder_forward.5} parent=1 // pred_check
      _
    $region31: #{encoder_forward.5} parent=1 // pred_check_branch
      %146 = sbr.rel (0) target = $region33
    $region32: #{encoder_forward.5} parent=1 // pred_region
      %148 = vsyncadd [#allocation3], 0
      %s150 = sshll.u32 [#allocation2], 4
      %s151 = int_to_ptr.vmem [resolvable:$true] %s150
      %s152 = sshll.u32 %s7, 4
      %s153 = int_to_ptr.hbm [resolvable:$true] %s152
      %155 = dma.vmem_to_hbm [thread:$0]  %s151, 128, %s153, [#allocation3]
    $region33: #{encoder_forward.5} parent=1 // pred_fallthru
      _
    // Predicated region
    $region34: #{encoder_forward.5} parent=1 // pred_check
      _
    $region35: #{encoder_forward.5} parent=1 // pred_check_branch
      %157 = sbr.rel (0) target = $region37
    $region36: #{encoder_forward.5} parent=1 // pred_region
      %159 = dma.done [#allocation3], 128
    $region37: #{encoder_forward.5} parent=1 // pred_fallthru
      _
    %160 = vsyncpa [#allocation3], 1

// kernel: encoder_forward.3
$region0: #{encoder_forward.3}
  #allocation0 [shape = 'u32[]', space=smem, size = 0x4, offset = 0x4, fixed_abs, tag = 'smem constant byte address 0x4 - core index']
  #allocation1 [shape = 'u32[72,128]{1,0:T(1,128)}', space=vmem, size = 0x9000, scoped, tag = 'internal scratch']
  %s0 = inlined_call_operand.hbm [shape: f32[8,32], index: 0, kind: input, shape index: {}]
  %s1 = inlined_call_operand.hbm [shape: bf16[32,512], index: 1, kind: input, shape index: {}]
  %s2 = inlined_call_operand.vmem [shape: f32[1,512], index: 2, kind: output, shape index: {0}]
  %s3 = inlined_call_operand.vmem [shape: f32[1,512], index: 3, kind: output, shape index: {1}]
  %4 = xla_tuple %s2, %s3
  %s5 = sld [smem:[#allocation0]]
  $region38: #{encoder_forward.3} parent=0
    _
  %s7 = ssub.s32 1, %s5
  %s8 = scalar_select 0, %s7, %s5
  $region1: #{encoder_forward.3} parent=0
    #allocation2 [shape = 'u8[4096]{0}', space=vmem, size = 0x1000, scoped, tag = 'input window, operand 0, single buffered']
    #allocation3 [shape = 's32[1]{0}', space=sflag, size = 0x4, scoped, tag = 'scoped memory for encoder_forward.3']
    #allocation4 [shape = 'u8[32768]{0}', space=vmem, size = 0x8000, scoped, tag = 'input window, operand 1, single buffered']
    #allocation5 [shape = 's32[1]{0}', space=sflag, size = 0x4, scoped, tag = 'scoped memory for encoder_forward.3']
    %9 = vsyncpa [#allocation3], 0
    %10 = vsyncpa [#allocation5], 0
    // Predicated region
    $region2: #{encoder_forward.3} parent=1 // pred_check
      _
    $region3: #{encoder_forward.3} parent=1 // pred_check_branch
      %12 = sbr.rel (0) target = $region5
    $region4: #{encoder_forward.3} parent=1 // pred_region
      %14 = vsyncadd [#allocation3], 0
      %s16 = sshll.u32 %s0, 4
      %s17 = int_to_ptr.hbm [resolvable:$true] %s16
      %s18 = sshll.u32 [#allocation2], 4
      %s19 = int_to_ptr.vmem [resolvable:$true] %s18
      %21 = dma.hbm_to_vmem [thread:$0]  %s17, 128, %s19, [#allocation3]
    $region5: #{encoder_forward.3} parent=1 // pred_fallthru
      _
    // Predicated region
    $region6: #{encoder_forward.3} parent=1 // pred_check
      _
    $region7: #{encoder_forward.3} parent=1 // pred_check_branch
      %23 = sbr.rel (0) target = $region9
    $region8: #{encoder_forward.3} parent=1 // pred_region
      %25 = vsyncadd [#allocation5], 0
      %s26 = sshll.u32 %s1, 4
      %s27 = int_to_ptr.hbm [resolvable:$true] %s26
      %s28 = sshll.u32 [#allocation4], 4
      %s29 = int_to_ptr.vmem [resolvable:$true] %s28
      %34 = dma.hbm_to_vmem [thread:$0]  %s27, 1024, %s29, [#allocation5], 256, 256, 16
    $region9: #{encoder_forward.3} parent=1 // pred_fallthru
      _
    // Predicated region
    $region10: #{encoder_forward.3} parent=1 // pred_check
      _
    $region11: #{encoder_forward.3} parent=1 // pred_check_branch
      %36 = sbr.rel (0) target = $region13
    $region12: #{encoder_forward.3} parent=1 // pred_region
      %38 = dma.done [#allocation3], 128
    $region13: #{encoder_forward.3} parent=1 // pred_fallthru
      _
    // Predicated region
    $region14: #{encoder_forward.3} parent=1 // pred_check
      _
    $region15: #{encoder_forward.3} parent=1 // pred_check_branch
      %40 = sbr.rel (0) target = $region17
    $region16: #{encoder_forward.3} parent=1 // pred_region
      %42 = dma.done [#allocation5], 1024
    $region17: #{encoder_forward.3} parent=1 // pred_fallthru
      _
    %v44 = vld [vmem:[#allocation2] sm:$0xff]
    %v45 = vpack.c.bf16 %v44, %v44
    %v46 = vld [vmem:[#allocation4] sm:$0xff]
    %v47 = vld [vmem:[#allocation4 + $0x8] sm:$0xff]
    %v48 = vld [vmem:[#allocation4 + $0x10] sm:$0xff]
    %v49 = vld [vmem:[#allocation4 + $0x18] sm:$0xff]
    %v50 = vld [vmem:[#allocation4 + $0x20] sm:$0xff]
    %v51 = vld [vmem:[#allocation4 + $0x28] sm:$0xff]
    %v52 = vld [vmem:[#allocation4 + $0x30] sm:$0xff]
    %v53 = vld [vmem:[#allocation4 + $0x38] sm:$0xff]
    %v62 = vunpack.c.l.b16 %v46
    %v63 = vunpack.c.h.b16 %v46
    %v64 = vunpack.c.l.b16 %v47
    %v65 = vunpack.c.h.b16 %v47
    %v66 = vunpack.c.l.b16 %v48
    %v67 = vunpack.c.h.b16 %v48
    %v68 = vunpack.c.l.b16 %v49
    %v69 = vunpack.c.h.b16 %v49
    %v70 = vunpack.c.l.b16 %v50
    %v71 = vunpack.c.h.b16 %v50
    %v72 = vunpack.c.l.b16 %v51
    %v73 = vunpack.c.h.b16 %v51
    %v74 = vunpack.c.l.b16 %v52
    %v75 = vunpack.c.h.b16 %v52
    %v76 = vunpack.c.l.b16 %v53
    %v77 = vunpack.c.h.b16 %v53
    %v78 = vpack.c.b16 %v66, %v62
    %v79 = vpack.c.b16 %v67, %v63
    %v80 = vpack.c.b16 %v68, %v64
    %v81 = vpack.c.b16 %v69, %v65
    %v82 = vpack.c.b16 %v74, %v70
    %v83 = vpack.c.b16 %v75, %v71
    %v84 = vpack.c.b16 %v76, %v72
    %v85 = vpack.c.b16 %v77, %v73
    %vm94 = vcmask 261120
    %v96 = vsel %vm94, %v45, 0
    %98 = vmatpush.bf16.msra.mxu0 0
    %99 = vmatpush.bf16.msra.mxu0 0
    %100 = vmatpush.bf16.msra.mxu0 0
    %101 = vmatpush.bf16.msra.mxu0 0
    %102 = vmatpush.bf16.msra.mxu0 0
    %103 = vmatpush.bf16.msra.mxu0 0
    %104 = vmatpush.bf16.msra.mxu0 %v82
    %105 = vmatpush.bf16.msra.mxu0 %v78
    %106 = vmatmul.bf16.gmra.mxu0 %v96
    %v107 = vpop.f32.mrf.mxu0
    %v108 = vadd.f32 0.0, %v107
    %v109 = vpop.f32.mrf.mxu0
    %110 = vdwg.mxu0
    %111 = vmatpush.bf16.msra.mxu0 0
    %112 = vmatpush.bf16.msra.mxu0 0
    %113 = vmatpush.bf16.msra.mxu0 0
    %114 = vmatpush.bf16.msra.mxu0 0
    %115 = vmatpush.bf16.msra.mxu0 0
    %116 = vmatpush.bf16.msra.mxu0 0
    %117 = vmatpush.bf16.msra.mxu0 %v83
    %118 = vmatpush.bf16.msra.mxu0 %v79
    %119 = vmatmul.bf16.gmra.mxu0 %v96
    %v120 = vpop.f32.mrf.mxu0
    %v121 = vadd.f32 0.0, %v120
    %v122 = vpop.f32.mrf.mxu0
    %123 = vdwg.mxu0
    %124 = vmatpush.bf16.msra.mxu0 0
    %125 = vmatpush.bf16.msra.mxu0 0
    %126 = vmatpush.bf16.msra.mxu0 0
    %127 = vmatpush.bf16.msra.mxu0 0
    %128 = vmatpush.bf16.msra.mxu0 0
    %129 = vmatpush.bf16.msra.mxu0 0
    %130 = vmatpush.bf16.msra.mxu0 %v84
    %131 = vmatpush.bf16.msra.mxu0 %v80
    %132 = vmatmul.bf16.gmra.mxu0 %v96
    %v133 = vpop.f32.mrf.mxu0
    %v134 = vadd.f32 0.0, %v133
    %v135 = vpop.f32.mrf.mxu0
    %136 = vdwg.mxu0
    %137 = vmatpush.bf16.msra.mxu0 0
    %138 = vmatpush.bf16.msra.mxu0 0
    %139 = vmatpush.bf16.msra.mxu0 0
    %140 = vmatpush.bf16.msra.mxu0 0
    %141 = vmatpush.bf16.msra.mxu0 0
    %142 = vmatpush.bf16.msra.mxu0 0
    %143 = vmatpush.bf16.msra.mxu0 %v85
    %144 = vmatpush.bf16.msra.mxu0 %v81
    %145 = vmatmul.bf16.gmra.mxu0 %v96
    %v146 = vpop.f32.mrf.mxu0
    %v147 = vadd.f32 0.0, %v146
    %v148 = vpop.f32.mrf.mxu0
    %149 = vdwg.mxu0
    %p150 = scmp.eq.s32.totalorder 0, 0
    // Predicated region
    $region18: #{encoder_forward.3} parent=1 // pred_check
      %p151 = pneg %p150
    $region19: #{encoder_forward.3} parent=1 // pred_check_branch
      %153 = sbr.rel (%p151) target = $region21
    $region20: #{encoder_forward.3} parent=1 // pred_region
      %v154 = vlaneseq
      %vm155 = vcmp.ge.s32.totalorder %v154, 0
      %vm156 = vcmp.lt.s32.totalorder %v154, 512
      %vm157 = vmand %vm155, %vm156
      %158 = vst.msk [vmem:[%s2] sm:$0xf] %vm157, 0.0
      %159 = vst.msk [vmem:[%s3] sm:$0xf] %vm157, 0.0
    $region21: #{encoder_forward.3} parent=1 // pred_fallthru
      _
    %v160 = vld [vmem:[%s2] sm:$0xf]
    %v161 = vrot.slane %v108, 4
    %v162 = vadd.f32 %v108, %v161
    %v163 = vrot.slane %v162, 2
    %v164 = vadd.f32 %v162, %v163
    %v165 = vrot.slane %v164, 1
    %v166 = vadd.f32 %v164, %v165
    %v167 = vrot.slane %v121, 4
    %v168 = vadd.f32 %v121, %v167
    %v169 = vrot.slane %v168, 2
    %v170 = vadd.f32 %v168, %v169
    %v171 = vrot.slane %v170, 1
    %v172 = vadd.f32 %v170, %v171
    %v173 = vrot.slane %v134, 4
    %v174 = vadd.f32 %v134, %v173
    %v175 = vrot.slane %v174, 2
    %v176 = vadd.f32 %v174, %v175
    %v177 = vrot.slane %v176, 1
    %v178 = vadd.f32 %v176, %v177
    %v179 = vrot.slane %v147, 4
    %v180 = vadd.f32 %v147, %v179
    %v181 = vrot.slane %v180, 2
    %v182 = vadd.f32 %v180, %v181
    %v183 = vrot.slane %v182, 1
    %v184 = vadd.f32 %v182, %v183
    %v189 = vrot.slane %v172, 7
    %v190 = vrot.slane %v178, 6
    %v191 = vrot.slane %v184, 5
    %vm192 = vcmask 1040384
    %v193 = vsel %vm192, %v166, %v189
    %vm194 = vcmask 1042434
    %v195 = vsel %vm194, %v190, %v191
    %vm196 = vcmask 1041408
    %v197 = vsel %vm196, %v193, %v195
    %v199 = vadd.f32 %v160, %v197
    %v200 = vlaneseq
    %vm201 = vcmp.ge.s32.totalorder %v200, 0
    %vm202 = vcmp.lt.s32.totalorder %v200, 512
    %vm203 = vmand %vm201, %vm202
    %204 = vst.msk [vmem:[%s2] sm:$0xf] %vm203, %v199
    %v205 = vld [vmem:[%s3] sm:$0xf]
    %v206 = vmul.f32 %v108, %v108
    %v207 = vmul.f32 %v121, %v121
    %v208 = vmul.f32 %v134, %v134
    %v209 = vmul.f32 %v147, %v147
    %v210 = vrot.slane %v206, 4
    %v211 = vadd.f32 %v206, %v210
    %v212 = vrot.slane %v211, 2
    %v213 = vadd.f32 %v211, %v212
    %v214 = vrot.slane %v213, 1
    %v215 = vadd.f32 %v213, %v214
    %v216 = vrot.slane %v207, 4
    %v217 = vadd.f32 %v207, %v216
    %v218 = vrot.slane %v217, 2
    %v219 = vadd.f32 %v217, %v218
    %v220 = vrot.slane %v219, 1
    %v221 = vadd.f32 %v219, %v220
    %v222 = vrot.slane %v208, 4
    %v223 = vadd.f32 %v208, %v222
    %v224 = vrot.slane %v223, 2
    %v225 = vadd.f32 %v223, %v224
    %v226 = vrot.slane %v225, 1
    %v227 = vadd.f32 %v225, %v226
    %v228 = vrot.slane %v209, 4
    %v229 = vadd.f32 %v209, %v228
    %v230 = vrot.slane %v229, 2
    %v231 = vadd.f32 %v229, %v230
    %v232 = vrot.slane %v231, 1
    %v233 = vadd.f32 %v231, %v232
    %v238 = vrot.slane %v221, 7
    %v239 = vrot.slane %v227, 6
    %v240 = vrot.slane %v233, 5
    %v241 = vsel %vm192, %v215, %v238
    %v242 = vsel %vm194, %v239, %v240
    %v243 = vsel %vm196, %v241, %v242
    %v245 = vadd.f32 %v205, %v243
    %246 = vst.msk [vmem:[%s3] sm:$0xf] %vm203, %v245
    // Predicated region
    $region22: #{encoder_forward.3} parent=1 // pred_check
      _
    $region23: #{encoder_forward.3} parent=1 // pred_check_branch
      %248 = sbr.rel (0) target = $region25
    $region24: #{encoder_forward.3} parent=1 // pred_region
      _
    $region25: #{encoder_forward.3} parent=1 // pred_fallthru
      _
    // Predicated region
    $region26: #{encoder_forward.3} parent=1 // pred_check
      _
    $region27: #{encoder_forward.3} parent=1 // pred_check_branch
      %250 = sbr.rel (0) target = $region29
    $region28: #{encoder_forward.3} parent=1 // pred_region
      _
    $region29: #{encoder_forward.3} parent=1 // pred_fallthru
      _
    // Predicated region
    $region30: #{encoder_forward.3} parent=1 // pred_check
      _
    $region31: #{encoder_forward.3} parent=1 // pred_check_branch
      %252 = sbr.rel (0) target = $region33
    $region32: #{encoder_forward.3} parent=1 // pred_region
      _
    $region33: #{encoder_forward.3} parent=1 // pred_fallthru
      _
    // Predicated region
    $region34: #{encoder_forward.3} parent=1 // pred_check
      _
    $region35: #{encoder_forward.3} parent=1 // pred_check_branch
      %254 = sbr.rel (0) target = $region37
    $region36: #{encoder_forward.3} parent=1 // pred_region
      _
    $region37: #{encoder_forward.3} parent=1 // pred_fallthru
      _
    %255 = vsyncpa [#allocation3], 1
    %256 = vsyncpa [#allocation5], 1

// kernel: encoder_forward.4
$region0: #{encoder_forward.4}
  #allocation0 [shape = 'u32[]', space=smem, size = 0x4, offset = 0x4, fixed_abs, tag = 'smem constant byte address 0x4 - core index']
  #allocation1 [shape = 'u32[72,128]{1,0:T(1,128)}', space=vmem, size = 0x9000, scoped, tag = 'internal scratch']
  %s0 = inlined_call_operand.hbm [shape: f32[8,32], index: 0, kind: input, shape index: {}]
  %s1 = inlined_call_operand.hbm [shape: bf16[32,512], index: 1, kind: input, shape index: {}]
  %s2 = inlined_call_operand.vmem [shape: f32[1,512], index: 2, kind: input, shape index: {}]
  %s3 = inlined_call_operand.vmem [shape: f32[1,512], index: 3, kind: input, shape index: {}]
  %s4 = inlined_call_operand.hbm [shape: f32[1,512], index: 4, kind: input, shape index: {}]
  %s5 = inlined_call_operand.hbm [shape: f32[1,512], index: 5, kind: input, shape index: {}]
  %s6 = inlined_call_operand.hbm [shape: bf16[512,128], index: 6, kind: input, shape index: {}]
  %s7 = inlined_call_operand.vmem [shape: bf16[8,128], index: 7, kind: output, shape index: {0}]
  %s8 = inlined_call_operand.vmem [shape: f32[1,128], index: 8, kind: output, shape index: {1}]
  %s9 = inlined_call_operand.vmem [shape: f32[1,128], index: 9, kind: output, shape index: {2}]
  %10 = xla_tuple %s7, %s8, %s9
  %s11 = sld [smem:[#allocation0]]
  $region78: #{encoder_forward.4} parent=0
    _
  %s13 = ssub.s32 1, %s11
  %s14 = scalar_select 0, %s13, %s11
  $region1: #{encoder_forward.4} parent=0
    #allocation2 [shape = 'u8[4096]{0}', space=vmem, size = 0x1000, scoped, tag = 'input window, operand 0, single buffered']
    #allocation3 [shape = 's32[1]{0}', space=sflag, size = 0x4, scoped, tag = 'scoped memory for encoder_forward.4']
    #allocation4 [shape = 'u8[32768]{0}', space=vmem, size = 0x8000, scoped, tag = 'input window, operand 1, single buffered']
    #allocation5 [shape = 's32[1]{0}', space=sflag, size = 0x4, scoped, tag = 'scoped memory for encoder_forward.4']
    #allocation6 [shape = 'u8[2048]{0}', space=vmem, size = 0x800, scoped, tag = 'input window, operand 4, single buffered']
    #allocation7 [shape = 'u8[2048]{0}', space=vmem, size = 0x800, scoped, tag = 'input window, operand 5, single buffered']
    #allocation8 [shape = 's32[1]{0}', space=sflag, size = 0x4, scoped, tag = 'scoped memory for encoder_forward.4']
    #allocation9 [shape = 'u8[131072]{0}', space=vmem, size = 0x20000, scoped, tag = 'input window, operand 6, single buffered']
    %15 = vsyncpa [#allocation3], 0
    %16 = vsyncpa [#allocation5], 0
    %17 = vsyncpa [#allocation8], 0
    // Predicated region
    $region2: #{encoder_forward.4} parent=1 // pred_check
      _
    $region3: #{encoder_forward.4} parent=1 // pred_check_branch
      %19 = sbr.rel (0) target = $region5
    $region4: #{encoder_forward.4} parent=1 // pred_region
      %21 = vsyncadd [#allocation3], 0
      %s23 = sshll.u32 %s0, 4
      %s24 = int_to_ptr.hbm [resolvable:$true] %s23
      %s25 = sshll.u32 [#allocation2], 4
      %s26 = int_to_ptr.vmem [resolvable:$true] %s25
      %28 = dma.hbm_to_vmem [thread:$0]  %s24, 128, %s26, [#allocation3]
    $region5: #{encoder_forward.4} parent=1 // pred_fallthru
      _
    // Predicated region
    $region6: #{encoder_forward.4} parent=1 // pred_check
      _
    $region7: #{encoder_forward.4} parent=1 // pred_check_branch
      %30 = sbr.rel (0) target = $region9
    $region8: #{encoder_forward.4} parent=1 // pred_region
      %32 = vsyncadd [#allocation5], 0
      %s33 = sshll.u32 %s1, 4
      %s34 = int_to_ptr.hbm [resolvable:$true] %s33
      %s35 = sshll.u32 [#allocation4], 4
      %s36 = int_to_ptr.vmem [resolvable:$true] %s35
      %41 = dma.hbm_to_vmem [thread:$0]  %s34, 1024, %s36, [#allocation5], 256, 256, 16
    $region9: #{encoder_forward.4} parent=1 // pred_fallthru
      _
    // Predicated region
    $region10: #{encoder_forward.4} parent=1 // pred_check
      _
    $region11: #{encoder_forward.4} parent=1 // pred_check_branch
      %43 = sbr.rel (0) target = $region13
    $region12: #{encoder_forward.4} parent=1 // pred_region
      _
    $region13: #{encoder_forward.4} parent=1 // pred_fallthru
      _
    // Predicated region
    $region14: #{encoder_forward.4} parent=1 // pred_check
      _
    $region15: #{encoder_forward.4} parent=1 // pred_check_branch
      %45 = sbr.rel (0) target = $region17
    $region16: #{encoder_forward.4} parent=1 // pred_region
      _
    $region17: #{encoder_forward.4} parent=1 // pred_fallthru
      _
    // Predicated region
    $region18: #{encoder_forward.4} parent=1 // pred_check
      _
    $region19: #{encoder_forward.4} parent=1 // pred_check_branch
      %47 = sbr.rel (0) target = $region21
    $region20: #{encoder_forward.4} parent=1 // pred_region
      %49 = vsyncadd [#allocation5], 0
      %s51 = sshll.u32 %s4, 4
      %s52 = int_to_ptr.hbm [resolvable:$true] %s51
      %s53 = sshll.u32 [#allocation6], 4
      %s54 = int_to_ptr.vmem [resolvable:$true] %s53
      %56 = dma.hbm_to_vmem [thread:$0]  %s52, 64, %s54, [#allocation5]
    $region21: #{encoder_forward.4} parent=1 // pred_fallthru
      _
    // Predicated region
    $region22: #{encoder_forward.4} parent=1 // pred_check
      _
    $region23: #{encoder_forward.4} parent=1 // pred_check_branch
      %58 = sbr.rel (0) target = $region25
    $region24: #{encoder_forward.4} parent=1 // pred_region
      %60 = vsyncadd [#allocation8], 0
      %s62 = sshll.u32 %s5, 4
      %s63 = int_to_ptr.hbm [resolvable:$true] %s62
      %s64 = sshll.u32 [#allocation7], 4
      %s65 = int_to_ptr.vmem [resolvable:$true] %s64
      %67 = dma.hbm_to_vmem [thread:$0]  %s63, 64, %s65, [#allocation8]
    $region25: #{encoder_forward.4} parent=1 // pred_fallthru
      _
    // Predicated region
    $region26: #{encoder_forward.4} parent=1 // pred_check
      _
    $region27: #{encoder_forward.4} parent=1 // pred_check_branch
      %69 = sbr.rel (0) target = $region29
    $region28: #{encoder_forward.4} parent=1 // pred_region
      %71 = vsyncadd [#allocation8], 0
      %s72 = sshll.u32 %s6, 4
      %s73 = int_to_ptr.hbm [resolvable:$true] %s72
      %s74 = sshll.u32 [#allocation9], 4
      %s75 = int_to_ptr.vmem [resolvable:$true] %s74
      %80 = dma.hbm_to_vmem [thread:$0]  %s73, 4096, %s75, [#allocation8], 64, 64, 4
    $region29: #{encoder_forward.4} parent=1 // pred_fallthru
      _
    // Predicated region
    $region30: #{encoder_forward.4} parent=1 // pred_check
      _
    $region31: #{encoder_forward.4} parent=1 // pred_check_branch
      %82 = sbr.rel (0) target = $region33
    $region32: #{encoder_forward.4} parent=1 // pred_region
      %84 = dma.done [#allocation3], 128
    $region33: #{encoder_forward.4} parent=1 // pred_fallthru
      _
    // Predicated region
    $region34: #{encoder_forward.4} parent=1 // pred_check
      _
    $region35: #{encoder_forward.4} parent=1 // pred_check_branch
      %86 = sbr.rel (0) target = $region37
    $region36: #{encoder_forward.4} parent=1 // pred_region
      %88 = dma.done [#allocation5], 1024
    $region37: #{encoder_forward.4} parent=1 // pred_fallthru
      _
    // Predicated region
    $region38: #{encoder_forward.4} parent=1 // pred_check
      _
    $region39: #{encoder_forward.4} parent=1 // pred_check_branch
      %90 = sbr.rel (0) target = $region41
    $region40: #{encoder_forward.4} parent=1 // pred_region
      %92 = dma.done [#allocation5], 64
    $region41: #{encoder_forward.4} parent=1 // pred_fallthru
      _
    // Predicated region
    $region42: #{encoder_forward.4} parent=1 // pred_check
      _
    $region43: #{encoder_forward.4} parent=1 // pred_check_branch
      %94 = sbr.rel (0) target = $region45
    $region44: #{encoder_forward.4} parent=1 // pred_region
      %96 = dma.done [#allocation8], 64
    $region45: #{encoder_forward.4} parent=1 // pred_fallthru
      _
    // Predicated region
    $region46: #{encoder_forward.4} parent=1 // pred_check
      _
    $region47: #{encoder_forward.4} parent=1 // pred_check_branch
      %98 = sbr.rel (0) target = $region49
    $region48: #{encoder_forward.4} parent=1 // pred_region
      %100 = dma.done [#allocation8], 4096
    $region49: #{encoder_forward.4} parent=1 // pred_fallthru
      _
    %v102 = vld [vmem:[#allocation2] sm:$0xff]
    %v103 = vpack.c.bf16 %v102, %v102
    %v104 = vld [vmem:[#allocation4] sm:$0xff]
    %v105 = vld [vmem:[#allocation4 + $0x8] sm:$0xff]
    %v106 = vld [vmem:[#allocation4 + $0x10] sm:$0xff]
    %v107 = vld [vmem:[#allocation4 + $0x18] sm:$0xff]
    %v108 = vld [vmem:[#allocation4 + $0x20] sm:$0xff]
    %v109 = vld [vmem:[#allocation4 + $0x28] sm:$0xff]
    %v110 = vld [vmem:[#allocation4 + $0x30] sm:$0xff]
    %v111 = vld [vmem:[#allocation4 + $0x38] sm:$0xff]
    %v120 = vunpack.c.l.b16 %v104
    %v121 = vunpack.c.h.b16 %v104
    %v122 = vunpack.c.l.b16 %v105
    %v123 = vunpack.c.h.b16 %v105
    %v124 = vunpack.c.l.b16 %v106
    %v125 = vunpack.c.h.b16 %v106
    %v126 = vunpack.c.l.b16 %v107
    %v127 = vunpack.c.h.b16 %v107
    %v128 = vunpack.c.l.b16 %v108
    %v129 = vunpack.c.h.b16 %v108
    %v130 = vunpack.c.l.b16 %v109
    %v131 = vunpack.c.h.b16 %v109
    %v132 = vunpack.c.l.b16 %v110
    %v133 = vunpack.c.h.b16 %v110
    %v134 = vunpack.c.l.b16 %v111
    %v135 = vunpack.c.h.b16 %v111
    %v136 = vpack.c.b16 %v124, %v120
    %v137 = vpack.c.b16 %v125, %v121
    %v138 = vpack.c.b16 %v126, %v122
    %v139 = vpack.c.b16 %v127, %v123
    %v140 = vpack.c.b16 %v132, %v128
    %v141 = vpack.c.b16 %v133, %v129
    %v142 = vpack.c.b16 %v134, %v130
    %v143 = vpack.c.b16 %v135, %v131
    %vm152 = vcmask 261120
    %v154 = vsel %vm152, %v103, 0
    %156 = vmatpush.bf16.msra.mxu0 0
    %157 = vmatpush.bf16.msra.mxu0 0
    %158 = vmatpush.bf16.msra.mxu0 0
    %159 = vmatpush.bf16.msra.mxu0 0
    %160 = vmatpush.bf16.msra.mxu0 0
    %161 = vmatpush.bf16.msra.mxu0 0
    %162 = vmatpush.bf16.msra.mxu0 %v140
    %163 = vmatpush.bf16.msra.mxu0 %v136
    %164 = vmatmul.bf16.gmra.mxu0 %v154
    %v165 = vpop.f32.mrf.mxu0
    %v166 = vadd.f32 0.0, %v165
    %v167 = vpop.f32.mrf.mxu0
    %168 = vdwg.mxu0
    %169 = vmatpush.bf16.msra.mxu0 0
    %170 = vmatpush.bf16.msra.mxu0 0
    %171 = vmatpush.bf16.msra.mxu0 0
    %172 = vmatpush.bf16.msra.mxu0 0
    %173 = vmatpush.bf16.msra.mxu0 0
    %174 = vmatpush.bf16.msra.mxu0 0
    %175 = vmatpush.bf16.msra.mxu0 %v141
    %176 = vmatpush.bf16.msra.mxu0 %v137
    %177 = vmatmul.bf16.gmra.mxu0 %v154
    %v178 = vpop.f32.mrf.mxu0
    %v179 = vadd.f32 0.0, %v178
    %v180 = vpop.f32.mrf.mxu0
    %181 = vdwg.mxu0
    %182 = vmatpush.bf16.msra.mxu0 0
    %183 = vmatpush.bf16.msra.mxu0 0
    %184 = vmatpush.bf16.msra.mxu0 0
    %185 = vmatpush.bf16.msra.mxu0 0
    %186 = vmatpush.bf16.msra.mxu0 0
    %187 = vmatpush.bf16.msra.mxu0 0
    %188 = vmatpush.bf16.msra.mxu0 %v142
    %189 = vmatpush.bf16.msra.mxu0 %v138
    %190 = vmatmul.bf16.gmra.mxu0 %v154
    %v191 = vpop.f32.mrf.mxu0
    %v192 = vadd.f32 0.0, %v191
    %v193 = vpop.f32.mrf.mxu0
    %194 = vdwg.mxu0
    %195 = vmatpush.bf16.msra.mxu0 0
    %196 = vmatpush.bf16.msra.mxu0 0
    %197 = vmatpush.bf16.msra.mxu0 0
    %198 = vmatpush.bf16.msra.mxu0 0
    %199 = vmatpush.bf16.msra.mxu0 0
    %200 = vmatpush.bf16.msra.mxu0 0
    %201 = vmatpush.bf16.msra.mxu0 %v143
    %202 = vmatpush.bf16.msra.mxu0 %v139
    %203 = vmatmul.bf16.gmra.mxu0 %v154
    %v204 = vpop.f32.mrf.mxu0
    %v205 = vadd.f32 0.0, %v204
    %v206 = vpop.f32.mrf.mxu0
    %207 = vdwg.mxu0
    %v208 = vld [vmem:[%s2] sm:$0xf]
    %v209 = vmul.f32 %v208, 0.125
    %v210 = vld [vmem:[%s3] sm:$0xf]
    %v211 = vmul.f32 %v210, 0.125
    %v212 = vmul.f32 %v209, %v209
    %v213 = vsub.f32 %v211, %v212
    %v214 = vmax.f32 %v213, 0.0
    %v215 = vld [vmem:[#allocation6] sm:$0xf]
    %v216 = vadd.f32 %v214, 1e-05
    %v217 = vrsqrt.pop %v216
    %v218 = vmul.f32 %v217, %v216
    %v219 = vmul.f32 %v218, %v217
    %v220 = vmul.f32 0.5, %v219
    %v221 = vsub.f32 1.5, %v220
    %v222 = vmul.f32 %v217, %v221
    %vm223 = vweird.f32 %v216
    %vm224 = vweird.f32 %v217
    %vm225 = vmor %vm223, %vm224
    %v226 = vsel %vm225, %v217, %v222
    %v227 = vmul.f32 %v215, %v226
    %v228 = vld [vmem:[#allocation7] sm:$0xf]
    %v229 = vmul.f32 %v209, %v227
    %v230 = vsub.f32 %v228, %v229
    %v232 = vperm.slane %v227, 0
    %v233 = vperm.slane %v227, 1
    %v234 = vperm.slane %v227, 2
    %v235 = vperm.slane %v227, 3
    %v240 = vmul.f32 %v166, %v232
    %v241 = vmul.f32 %v179, %v233
    %v242 = vmul.f32 %v192, %v234
    %v243 = vmul.f32 %v205, %v235
    %v245 = vperm.slane %v230, 0
    %v246 = vperm.slane %v230, 1
    %v247 = vperm.slane %v230, 2
    %v248 = vperm.slane %v230, 3
    %v253 = vadd.f32 %v240, %v245
    %v254 = vadd.f32 %v241, %v246
    %v255 = vadd.f32 %v242, %v247
    %v256 = vadd.f32 %v243, %v248
    %v257 = vmax.f32 %v253, 0.0
    %v258 = vmax.f32 %v254, 0.0
    %v259 = vmax.f32 %v255, 0.0
    %v260 = vmax.f32 %v256, 0.0
    %v261 = vpack.c.bf16 %v257, %v257
    %v262 = vpack.c.bf16 %v258, %v258
    %v263 = vpack.c.bf16 %v259, %v259
    %v264 = vpack.c.bf16 %v260, %v260
    %v265 = vld [vmem:[#allocation9] sm:$0xf]
    %v266 = vld [vmem:[#allocation9 + $0x4] sm:$0xf]
    %v267 = vld [vmem:[#allocation9 + $0x8] sm:$0xf]
    %v268 = vld [vmem:[#allocation9 + $0xc] sm:$0xf]
    %v269 = vld [vmem:[#allocation9 + $0x10] sm:$0xf]
    %v270 = vld [vmem:[#allocation9 + $0x14] sm:$0xf]
    %v271 = vld [vmem:[#allocation9 + $0x18] sm:$0xf]
    %v272 = vld [vmem:[#allocation9 + $0x1c] sm:$0xf]
    %v273 = vld [vmem:[#allocation9 + $0x20] sm:$0xf]
    %v274 = vld [vmem:[#allocation9 + $0x24] sm:$0xf]
    %v275 = vld [vmem:[#allocation9 + $0x28] sm:$0xf]
    %v276 = vld [vmem:[#allocation9 + $0x2c] sm:$0xf]
    %v277 = vld [vmem:[#allocation9 + $0x30] sm:$0xf]
    %v278 = vld [vmem:[#allocation9 + $0x34] sm:$0xf]
    %v279 = vld [vmem:[#allocation9 + $0x38] sm:$0xf]
    %v280 = vld [vmem:[#allocation9 + $0x3c] sm:$0xf]
    %v281 = vld [vmem:[#allocation9 + $0x40] sm:$0xf]
    %v282 = vld [vmem:[#allocation9 + $0x44] sm:$0xf]
    %v283 = vld [vmem:[#allocation9 + $0x48] sm:$0xf]
    %v284 = vld [vmem:[#allocation9 + $0x4c] sm:$0xf]
    %v285 = vld [vmem:[#allocation9 + $0x50] sm:$0xf]
    %v286 = vld [vmem:[#allocation9 + $0x54] sm:$0xf]
    %v287 = vld [vmem:[#allocation9 + $0x58] sm:$0xf]
    %v288 = vld [vmem:[#allocation9 + $0x5c] sm:$0xf]
    %v289 = vld [vmem:[#allocation9 + $0x60] sm:$0xf]
    %v290 = vld [vmem:[#allocation9 + $0x64] sm:$0xf]
    %v291 = vld [vmem:[#allocation9 + $0x68] sm:$0xf]
    %v292 = vld [vmem:[#allocation9 + $0x6c] sm:$0xf]
    %v293 = vld [vmem:[#allocation9 + $0x70] sm:$0xf]
    %v294 = vld [vmem:[#allocation9 + $0x74] sm:$0xf]
    %v295 = vld [vmem:[#allocation9 + $0x78] sm:$0xf]
    %v296 = vld [vmem:[#allocation9 + $0x7c] sm:$0xf]
    %v297 = vld [vmem:[#allocation9 + $0x80] sm:$0xf]
    %v298 = vld [vmem:[#allocation9 + $0x84] sm:$0xf]
    %v299 = vld [vmem:[#allocation9 + $0x88] sm:$0xf]
    %v300 = vld [vmem:[#allocation9 + $0x8c] sm:$0xf]
    %v301 = vld [vmem:[#allocation9 + $0x90] sm:$0xf]
    %v302 = vld [vmem:[#allocation9 + $0x94] sm:$0xf]
    %v303 = vld [vmem:[#allocation9 + $0x98] sm:$0xf]
    %v304 = vld [vmem:[#allocation9 + $0x9c] sm:$0xf]
    %v305 = vld [vmem:[#allocation9 + $0xa0] sm:$0xf]
    %v306 = vld [vmem:[#allocation9 + $0xa4] sm:$0xf]
    %v307 = vld [vmem:[#allocation9 + $0xa8] sm:$0xf]
    %v308 = vld [vmem:[#allocation9 + $0xac] sm:$0xf]
    %v309 = vld [vmem:[#allocation9 + $0xb0] sm:$0xf]
    %v310 = vld [vmem:[#allocation9 + $0xb4] sm:$0xf]
    %v311 = vld [vmem:[#allocation9 + $0xb8] sm:$0xf]
    %v312 = vld [vmem:[#allocation9 + $0xbc] sm:$0xf]
    %v313 = vld [vmem:[#allocation9 + $0xc0] sm:$0xf]
    %v314 = vld [vmem:[#allocation9 + $0xc4] sm:$0xf]
    %v315 = vld [vmem:[#allocation9 + $0xc8] sm:$0xf]
    %v316 = vld [vmem:[#allocation9 + $0xcc] sm:$0xf]
    %v317 = vld [vmem:[#allocation9 + $0xd0] sm:$0xf]
    %v318 = vld [vmem:[#allocation9 + $0xd4] sm:$0xf]
    %v319 = vld [vmem:[#allocation9 + $0xd8] sm:$0xf]
    %v320 = vld [vmem:[#allocation9 + $0xdc] sm:$0xf]
    %v321 = vld [vmem:[#allocation9 + $0xe0] sm:$0xf]
    %v322 = vld [vmem:[#allocation9 + $0xe4] sm:$0xf]
    %v323 = vld [vmem:[#allocation9 + $0xe8] sm:$0xf]
    %v324 = vld [vmem:[#allocation9 + $0xec] sm:$0xf]
    %v325 = vld [vmem:[#allocation9 + $0xf0] sm:$0xf]
    %v326 = vld [vmem:[#allocation9 + $0xf4] sm:$0xf]
    %v327 = vld [vmem:[#allocation9 + $0xf8] sm:$0xf]
    %v328 = vld [vmem:[#allocation9 + $0xfc] sm:$0xf]
    %v393 = vunpack.c.l.b16 %v265
    %v394 = vunpack.c.l.b16 %v266
    %v395 = vunpack.c.l.b16 %v267
    %v396 = vunpack.c.l.b16 %v268
    %v397 = vunpack.c.l.b16 %v269
    %v398 = vunpack.c.l.b16 %v270
    %v399 = vunpack.c.l.b16 %v271
    %v400 = vunpack.c.l.b16 %v272
    %v401 = vunpack.c.l.b16 %v273
    %v402 = vunpack.c.l.b16 %v274
    %v403 = vunpack.c.l.b16 %v275
    %v404 = vunpack.c.l.b16 %v276
    %v405 = vunpack.c.l.b16 %v277
    %v406 = vunpack.c.l.b16 %v278
    %v407 = vunpack.c.l.b16 %v279
    %v408 = vunpack.c.l.b16 %v280
    %v409 = vunpack.c.l.b16 %v281
    %v410 = vunpack.c.l.b16 %v282
    %v411 = vunpack.c.l.b16 %v283
    %v412 = vunpack.c.l.b16 %v284
    %v413 = vunpack.c.l.b16 %v285
    %v414 = vunpack.c.l.b16 %v286
    %v415 = vunpack.c.l.b16 %v287
    %v416 = vunpack.c.l.b16 %v288
    %v417 = vunpack.c.l.b16 %v289
    %v418 = vunpack.c.l.b16 %v290
    %v419 = vunpack.c.l.b16 %v291
    %v420 = vunpack.c.l.b16 %v292
    %v421 = vunpack.c.l.b16 %v293
    %v422 = vunpack.c.l.b16 %v294
    %v423 = vunpack.c.l.b16 %v295
    %v424 = vunpack.c.l.b16 %v296
    %v425 = vunpack.c.l.b16 %v297
    %v426 = vunpack.c.l.b16 %v298
    %v427 = vunpack.c.l.b16 %v299
    %v428 = vunpack.c.l.b16 %v300
    %v429 = vunpack.c.l.b16 %v301
    %v430 = vunpack.c.l.b16 %v302
    %v431 = vunpack.c.l.b16 %v303
    %v432 = vunpack.c.l.b16 %v304
    %v433 = vunpack.c.l.b16 %v305
    %v434 = vunpack.c.l.b16 %v306
    %v435 = vunpack.c.l.b16 %v307
    %v436 = vunpack.c.l.b16 %v308
    %v437 = vunpack.c.l.b16 %v309
    %v438 = vunpack.c.l.b16 %v310
    %v439 = vunpack.c.l.b16 %v311
    %v440 = vunpack.c.l.b16 %v312
    %v441 = vunpack.c.l.b16 %v313
    %v442 = vunpack.c.l.b16 %v314
    %v443 = vunpack.c.l.b16 %v315
    %v444 = vunpack.c.l.b16 %v316
    %v445 = vunpack.c.l.b16 %v317
    %v446 = vunpack.c.l.b16 %v318
    %v447 = vunpack.c.l.b16 %v319
    %v448 = vunpack.c.l.b16 %v320
    %v449 = vunpack.c.l.b16 %v321
    %v450 = vunpack.c.l.b16 %v322
    %v451 = vunpack.c.l.b16 %v323
    %v452 = vunpack.c.l.b16 %v324
    %v453 = vunpack.c.l.b16 %v325
    %v454 = vunpack.c.l.b16 %v326
    %v455 = vunpack.c.l.b16 %v327
    %v456 = vunpack.c.l.b16 %v328
    %v457 = vpack.c.b16 %v394, %v393
    %v458 = vpack.c.b16 %v396, %v395
    %v459 = vpack.c.b16 %v398, %v397
    %v460 = vpack.c.b16 %v400, %v399
    %v461 = vpack.c.b16 %v402, %v401
    %v462 = vpack.c.b16 %v404, %v403
    %v463 = vpack.c.b16 %v406, %v405
    %v464 = vpack.c.b16 %v408, %v407
    %v465 = vpack.c.b16 %v410, %v409
    %v466 = vpack.c.b16 %v412, %v411
    %v467 = vpack.c.b16 %v414, %v413
    %v468 = vpack.c.b16 %v416, %v415
    %v469 = vpack.c.b16 %v418, %v417
    %v470 = vpack.c.b16 %v420, %v419
    %v471 = vpack.c.b16 %v422, %v421
    %v472 = vpack.c.b16 %v424, %v423
    %v473 = vpack.c.b16 %v426, %v425
    %v474 = vpack.c.b16 %v428, %v427
    %v475 = vpack.c.b16 %v430, %v429
    %v476 = vpack.c.b16 %v432, %v431
    %v477 = vpack.c.b16 %v434, %v433
    %v478 = vpack.c.b16 %v436, %v435
    %v479 = vpack.c.b16 %v438, %v437
    %v480 = vpack.c.b16 %v440, %v439
    %v481 = vpack.c.b16 %v442, %v441
    %v482 = vpack.c.b16 %v444, %v443
    %v483 = vpack.c.b16 %v446, %v445
    %v484 = vpack.c.b16 %v448, %v447
    %v485 = vpack.c.b16 %v450, %v449
    %v486 = vpack.c.b16 %v452, %v451
    %v487 = vpack.c.b16 %v454, %v453
    %v488 = vpack.c.b16 %v456, %v455
    %521 = vmatpush.bf16.msra.mxu0 %v464
    %522 = vmatpush.bf16.msra.mxu0 %v463
    %523 = vmatpush.bf16.msra.mxu0 %v462
    %524 = vmatpush.bf16.msra.mxu0 %v461
    %525 = vmatpush.bf16.msra.mxu0 %v460
    %526 = vmatpush.bf16.msra.mxu0 %v459
    %527 = vmatpush.bf16.msra.mxu0 %v458
    %528 = vmatpush.bf16.msra.mxu0 %v457
    %529 = vmatmul.bf16.gmra.mxu0 %v261
    %v530 = vpop.f32.mrf.mxu0
    %v531 = vadd.f32 0.0, %v530
    %v532 = vpop.f32.mrf.mxu0
    %533 = vdwg.mxu0
    %534 = vmatpush.bf16.msra.mxu0 %v472
    %535 = vmatpush.bf16.msra.mxu0 %v471
    %536 = vmatpush.bf16.msra.mxu0 %v470
    %537 = vmatpush.bf16.msra.mxu0 %v469
    %538 = vmatpush.bf16.msra.mxu0 %v468
    %539 = vmatpush.bf16.msra.mxu0 %v467
    %540 = vmatpush.bf16.msra.mxu0 %v466
    %541 = vmatpush.bf16.msra.mxu0 %v465
    %542 = vmatmul.bf16.gmra.mxu0 %v262
    %v543 = vpop.f32.mrf.mxu0
    %v544 = vadd.f32 %v531, %v543
    %v545 = vpop.f32.mrf.mxu0
    %546 = vdwg.mxu0
    %547 = vmatpush.bf16.msra.mxu0 %v480
    %548 = vmatpush.bf16.msra.mxu0 %v479
    %549 = vmatpush.bf16.msra.mxu0 %v478
    %550 = vmatpush.bf16.msra.mxu0 %v477
    %551 = vmatpush.bf16.msra.mxu0 %v476
    %552 = vmatpush.bf16.msra.mxu0 %v475
    %553 = vmatpush.bf16.msra.mxu0 %v474
    %554 = vmatpush.bf16.msra.mxu0 %v473
    %555 = vmatmul.bf16.gmra.mxu0 %v263
    %v556 = vpop.f32.mrf.mxu0
    %v557 = vadd.f32 %v544, %v556
    %v558 = vpop.f32.mrf.mxu0
    %559 = vdwg.mxu0
    %560 = vmatpush.bf16.msra.mxu0 %v488
    %561 = vmatpush.bf16.msra.mxu0 %v487
    %562 = vmatpush.bf16.msra.mxu0 %v486
    %563 = vmatpush.bf16.msra.mxu0 %v485
    %564 = vmatpush.bf16.msra.mxu0 %v484
    %565 = vmatpush.bf16.msra.mxu0 %v483
    %566 = vmatpush.bf16.msra.mxu0 %v482
    %567 = vmatpush.bf16.msra.mxu0 %v481
    %568 = vmatmul.bf16.gmra.mxu0 %v264
    %v569 = vpop.f32.mrf.mxu0
    %v570 = vadd.f32 %v557, %v569
    %v571 = vpop.f32.mrf.mxu0
    %572 = vdwg.mxu0
    %v573 = vpack.c.bf16 %v570, %v570
    %574 = vst [vmem:[%s7] sm:$0xf] %v573
    %p575 = scmp.eq.s32.totalorder 0, 0
    // Predicated region
    $region50: #{encoder_forward.4} parent=1 // pred_check
      %p576 = pneg %p575
    $region51: #{encoder_forward.4} parent=1 // pred_check_branch
      %578 = sbr.rel (%p576) target = $region53
    $region52: #{encoder_forward.4} parent=1 // pred_region
      %579 = vst [vmem:[%s8] sm:$0x1] 0.0
      %580 = vst [vmem:[%s9] sm:$0x1] 0.0
    $region53: #{encoder_forward.4} parent=1 // pred_fallthru
      _
    %v581 = vld [vmem:[%s8] sm:$0x1]
    %v582 = vrot.slane %v570, 4
    %v583 = vadd.f32 %v570, %v582
    %v584 = vrot.slane %v583, 2
    %v585 = vadd.f32 %v583, %v584
    %v586 = vrot.slane %v585, 1
    %v587 = vadd.f32 %v585, %v586
    %v588 = vadd.f32 %v581, %v587
    %589 = vst [vmem:[%s8] sm:$0x1] %v588
    %v590 = vld [vmem:[%s9] sm:$0x1]
    %v591 = vmul.f32 %v570, %v570
    %v592 = vrot.slane %v591, 4
    %v593 = vadd.f32 %v591, %v592
    %v594 = vrot.slane %v593, 2
    %v595 = vadd.f32 %v593, %v594
    %v596 = vrot.slane %v595, 1
    %v597 = vadd.f32 %v595, %v596
    %v598 = vadd.f32 %v590, %v597
    %599 = vst [vmem:[%s9] sm:$0x1] %v598
    // Predicated region
    $region54: #{encoder_forward.4} parent=1 // pred_check
      _
    $region55: #{encoder_forward.4} parent=1 // pred_check_branch
      %601 = sbr.rel (0) target = $region57
    $region56: #{encoder_forward.4} parent=1 // pred_region
      _
    $region57: #{encoder_forward.4} parent=1 // pred_fallthru
      _
    // Predicated region
    $region58: #{encoder_forward.4} parent=1 // pred_check
      _
    $region59: #{encoder_forward.4} parent=1 // pred_check_branch
      %603 = sbr.rel (0) target = $region61
    $region60: #{encoder_forward.4} parent=1 // pred_region
      _
    $region61: #{encoder_forward.4} parent=1 // pred_fallthru
      _
    // Predicated region
    $region62: #{encoder_forward.4} parent=1 // pred_check
      _
    $region63: #{encoder_forward.4} parent=1 // pred_check_branch
      %605 = sbr.rel (0) target = $region65
    $region64: #{encoder_forward.4} parent=1 // pred_region
      _
    $region65: #{encoder_forward.4} parent=1 // pred_fallthru
      _
    // Predicated region
    $region66: #{encoder_forward.4} parent=1 // pred_check
      _
    $region67: #{encoder_forward.4} parent=1 // pred_check_branch
      %607 = sbr.rel (0) target = $region69
    $region68: #{encoder_forward.4} parent=1 // pred_region
      _
    $region69: #{encoder_forward.4} parent=1 // pred_fallthru
      _
    // Predicated region
    $region70: #{encoder_forward.4} parent=1 // pred_check
      _
    $region71: #{encoder_forward.4} parent=1 // pred_check_branch
      %609 = sbr.rel (0) target = $region73
    $region72: #{encoder_forward.4} parent=1 // pred_region
      _
    $region73: #{encoder_forward.4} parent=1 // pred_fallthru
      _
    // Predicated region
    $region74: #{encoder_forward.4} parent=1 // pred_check
      _
    $region75: #{encoder_forward.4} parent=1 // pred_check_branch
      %611 = sbr.rel (0) target = $region77
    $region76: #{encoder_forward.4} parent=1 // pred_region
      _
    $region77: #{encoder_forward.4} parent=1 // pred_fallthru
      _
    %612 = vsyncpa [#allocation3], 1
    %613 = vsyncpa [#allocation5], 1
    %614 = vsyncpa [#allocation8], 1

</llo_original>
